<compile_context>
chip_gen: v7x
topology: tpu7x:2x2x1
jax: 0.10.0
libtpu: 0.0.40
codegen_flags: <defaults>
</compile_context>

<pallas_src>
import functools
import math

import jax
import jax.numpy as jnp
from jax.experimental import pallas as pl
from jax.experimental.pallas import tpu as pltpu


def _layer_norm(v, w, b, eps=1e-5):
    # Matches torch LayerNorm (biased variance, eps inside rsqrt), f32 math.
    v32 = v.astype(jnp.float32)
    mu = jnp.mean(v32, axis=-1, keepdims=True)
    var = jnp.mean((v32 - mu) ** 2, axis=-1, keepdims=True)
    return (v32 - mu) * jax.lax.rsqrt(var + eps) * w + b


def _residual_attention_block_kernel(
        x_ref, mask_ref,
        ln1w_ref, ln1b_ref,
        wqkv_t_ref, bqkv_ref, wo_t_ref, bo_ref,
        ln2w_ref, ln2b_ref,
        wfc_t_ref, bfc_ref, wproj_t_ref, bproj_ref,
        o_ref,
        *, n_head, seq_len):
    cdt = wqkv_t_ref.dtype               # MXU operand dtype (f32 or bf16)
    Bt, Lp, D = x_ref.shape
    hd = D // n_head
    rows = Bt * Lp

    x = x_ref[...].astype(jnp.float32).reshape(rows, D)

    # ---------- attention branch: x + out_proj(MHA(ln_1(x))) ---------------
    xn = _layer_norm(x, ln1w_ref[...], ln1b_ref[...]).astype(cdt)
    # 1/sqrt(hd) is pre-folded into the Q rows of the in-projection.
    qkv = (jnp.dot(xn, wqkv_t_ref[...], preferred_element_type=jnp.float32)
           + bqkv_ref[...]).astype(cdt)                      # (rows, 3D), compute dtype

    # Head-major batched attention: heads are stacked into the batch dim so the
    # score / PV contractions are single dot_generals (MXU pushes back-to-back)
    # and the softmax runs once over the whole (H*Bt, Lp, Lp) tensor.
    q = jnp.concatenate(
        [qkv[:, 0 * D + h * hd:0 * D + (h + 1) * hd].reshape(Bt, Lp, hd)
         for h in range(n_head)], axis=0)                    # (H*Bt, Lp, hd)
    k = jnp.concatenate(
        [qkv[:, 1 * D + h * hd:1 * D + (h + 1) * hd].reshape(Bt, Lp, hd)
         for h in range(n_head)], axis=0)
    v = jnp.concatenate(
        [qkv[:, 2 * D + h * hd:2 * D + (h + 1) * hd].reshape(Bt, Lp, hd)
         for h in range(n_head)], axis=0)

    # Additive mask; pad-key cutoff generated in-kernel (static seq_len), so no
    # -inf has to be baked into the DMA'd mask block.
    mask = mask_ref[...]                                     # (Lp, Lp) f32
    if seq_len < Lp:
        kidx = jax.lax.broadcasted_iota(jnp.int32, (Lp, Lp), 1)
        mask = jnp.where(kidx >= seq_len, -jnp.inf, mask)

    s = jnp.einsum("bqd,bkd->bqk", q, k,
                   preferred_element_type=jnp.float32) + mask[None]  # (HB,Lp,Lp) f32
    s = s - jnp.max(s, axis=-1, keepdims=True)
    p = jnp.exp(s)
    denom = jnp.sum(p, axis=-1, keepdims=True)
    if cdt == jnp.float32:
        p = p / denom                                 # exact reciprocal on f32 path
    else:
        p = p * pl.reciprocal(denom, approx=True)     # EUP slot, ~2^-12 rel err
    o = jnp.einsum("bqk,bkd->bqd", p.astype(cdt), v,
                   preferred_element_type=jnp.float32)       # (H*Bt, Lp, hd)

    attn_in = jnp.concatenate(
        [o[h * Bt:(h + 1) * Bt] for h in range(n_head)], axis=-1)   # (Bt, Lp, D)
    attn = (jnp.dot(attn_in.reshape(rows, D).astype(cdt), wo_t_ref[...],
                    preferred_element_type=jnp.float32) + bo_ref[...])
    x = x + attn

    # ---------- MLP branch: x + c_proj(QuickGELU(c_fc(ln_2(x)))) -----------
    xn2 = _layer_norm(x, ln2w_ref[...], ln2b_ref[...]).astype(cdt)
    h1 = (jnp.dot(xn2, wfc_t_ref[...], preferred_element_type=jnp.float32)
          + bfc_ref[...])                                    # (rows, 4D) f32
    h1 = h1 * jax.nn.sigmoid(1.702 * h1)                     # QuickGELU (f32, EUP)
    h2 = (jnp.dot(h1.astype(cdt), wproj_t_ref[...],
                  preferred_element_type=jnp.float32) + bproj_ref[...])
    x = x + h2

    o_ref[...] = x.reshape(Bt, Lp, D).astype(o_ref.dtype)


def _vmem_capacity_bytes():
    # Generation-aware VMEM capacity (v7x: 64 MiB/TC, v5e/v6e: 128 MiB).
    try:
        return int(pltpu.get_tpu_info().vmem_capacity_bytes)
    except Exception:
        return 64 << 20   # conservative fallback (v7x per-TensorCore)


def _const_spec(a):
    nd = a.ndim
    return pl.BlockSpec(a.shape, lambda n, _nd=nd: (0,) * _nd)


def residual_attention_block(x, params, attn_mask, n_head, *,
                             param_dtype=jnp.float32, batch_block=None,
                             batch_major=False):
    """CLIP ResidualAttentionBlock forward.

    x: (L, N, D) like torch.nn.MultiheadAttention (batch_first=False), or
    (N, L, D) if batch_major=True (preferred when stacking blocks: transpose
    once at model entry instead of per block). jit-compatible; wrap the whole
    model in jax.jit so weight prep / scale folding is done once per compile.
    """
    if batch_major:
        N, L, D = x.shape
    else:
        L, N, D = x.shape
    assert D % n_head == 0
    hd = D // n_head

    # Pad seq-len so the slab's sublane dim stays (8,128)-tile aligned.
    sub = 8 if jnp.dtype(x.dtype).itemsize >= 4 else 16
    Lp = ((L + sub - 1) // sub) * sub

    xb = x if batch_major else jnp.transpose(x, (1, 0, 2))   # (N, L, D)
    if Lp != L:
        xb = jnp.pad(xb, ((0, 0), (0, Lp - L), (0, 0)))

    # User additive mask (zero-padded only; pad-key -inf generated in-kernel).
    mask = jnp.zeros((Lp, Lp), jnp.float32)
    if attn_mask is not None:
        mask = mask.at[:L, :L].set(attn_mask.astype(jnp.float32))

    # Fold 1/sqrt(head_dim) into the Q rows of the in-projection.
    scale = 1.0 / math.sqrt(hd)
    qscale = jnp.concatenate([jnp.full((D,), scale, jnp.float32),
                              jnp.ones((2 * D,), jnp.float32)])
    in_w = params["in_proj_w"].astype(jnp.float32) * qscale[:, None]
    in_b = params["in_proj_b"].astype(jnp.float32) * qscale

    wd = param_dtype
    const_args = (
        mask,
        params["ln1_w"].reshape(1, D).astype(jnp.float32),
        params["ln1_b"].reshape(1, D).astype(jnp.float32),
        in_w.T.astype(wd),                                   # (D, 3D)
        in_b.reshape(1, 3 * D).astype(jnp.float32),
        params["out_proj_w"].T.astype(wd),                   # (D, D)
        params["out_proj_b"].reshape(1, D).astype(jnp.float32),
        params["ln2_w"].reshape(1, D).astype(jnp.float32),
        params["ln2_b"].reshape(1, D).astype(jnp.float32),
        params["fc_w"].T.astype(wd),                         # (D, 4D)
        params["fc_b"].reshape(1, 4 * D).astype(jnp.float32),
        params["proj_w"].T.astype(wd),                       # (4D, D)
        params["proj_b"].reshape(1, D).astype(jnp.float32),
    )
    const_bytes = sum(int(a.size) * a.dtype.itemsize for a in const_args)

    csz = jnp.dtype(wd).itemsize
    xsz = jnp.dtype(x.dtype).itemsize
    vmem_cap = _vmem_capacity_bytes()

    def _step_bytes(Bt):
        rows = Bt * Lp
        io = 2 * 2 * rows * D * xsz                        # in+out slabs, double buffered
        act = 4 * rows * D                                  # residual stream (f32)
        act += csz * rows * 3 * D * 2                       # qkv + stacked q/k/v
        act += (4 + csz) * n_head * Bt * Lp * Lp            # scores f32 + probs cdt
        act += csz * rows * D + 4 * rows * D                # head concat + attn f32
        act += (4 + csz) * rows * 4 * D                     # h1 f32 + downcast copy
        act += 2 * 4 * rows * D                             # LN / misc temporaries
        return io + 2 * const_bytes + int(1.25 * act)

    if batch_block is None:
        budget = int(0.85 * vmem_cap)
        fit = [d for d in range(1, N + 1)
               if N % d == 0 and d * Lp <= 4096 and _step_bytes(d) <= budget]
        Bt = max(fit) if fit else 1
        # Prefer >=2 grid steps (v7x has 2 TensorCores) unless it starves the slab.
        if Bt == N and N > 1:
            smaller = [d for d in fit if d < N and d * Lp >= 256]
            if smaller:
                Bt = max(smaller)
    else:
        Bt = batch_block
        assert N % Bt == 0, "batch must be divisible by batch_block"

    vmem_limit = int(min(max(_step_bytes(Bt) + (8 << 20), 32 << 20),
                         int(0.9 * vmem_cap)))

    kernel = functools.partial(_residual_attention_block_kernel,
                               n_head=n_head, seq_len=L)

    out = pl.pallas_call(
        kernel,
        out_shape=jax.ShapeDtypeStruct((N, Lp, D), x.dtype),
        grid_spec=pltpu.PrefetchScalarGridSpec(
            num_scalar_prefetch=0,
            grid=(N // Bt,),
            in_specs=[pl.BlockSpec((Bt, Lp, D), lambda n: (n, 0, 0))]
                     + [_const_spec(a) for a in const_args],
            out_specs=pl.BlockSpec((Bt, Lp, D), lambda n: (n, 0, 0)),
        ),
        compiler_params=pltpu.CompilerParams(
            dimension_semantics=("parallel",),
            vmem_limit_bytes=vmem_limit),
    )(xb, *const_args)

    out = out[:, :L, :]                                      # drop seq padding
    if not batch_major:
        out = jnp.transpose(out, (1, 0, 2))                  # back to (L, N, D)
    return out


def _reference(x, params, attn_mask, n_head):
    # Pure-JAX reference mirroring the PyTorch module, for verification.
    L, N, D = x.shape
    hd = D // n_head

    def ln(v, w, b):
        mu = jnp.mean(v, -1, keepdims=True)
        var = jnp.mean((v - mu) ** 2, -1, keepdims=True)
        return (v - mu) / jnp.sqrt(var + 1e-5) * w + b

    with jax.default_matmul_precision("highest"):
        xn = ln(x, params["ln1_w"], params["ln1_b"])
        qkv = xn @ params["in_proj_w"].T + params["in_proj_b"]
        q, k, v = jnp.split(qkv, 3, axis=-1)
        q = q * (hd ** -0.5)

        def heads(t):  # (L, N, D) -> (N*H, L, hd)
            return jnp.transpose(t.reshape(L, N * n_head, hd), (1, 0, 2))

        qh, kh, vh = heads(q), heads(k), heads(v)
        s = jnp.einsum("bld,bmd->blm", qh, kh) + attn_mask[None]
        p = jax.nn.softmax(s, axis=-1)
        o = jnp.einsum("blm,bmd->bld", p, vh)
        o = jnp.transpose(o, (1, 0, 2)).reshape(L, N, D)
        o = o @ params["out_proj_w"].T + params["out_proj_b"]
        x = x + o

        xn2 = ln(x, params["ln2_w"], params["ln2_b"])
        h1 = xn2 @ params["fc_w"].T + params["fc_b"]
        h1 = h1 * jax.nn.sigmoid(1.702 * h1)
        h2 = h1 @ params["proj_w"].T + params["proj_b"]
        return x + h2


if __name__ == "__main__":
    D, H = 32, 4                                          # d_model, heads (hd=8)
    key = jax.random.PRNGKey(0)
    ks = jax.random.split(key, 8)

    params = {
        "ln1_w": jnp.ones((D,), jnp.float32),
        "ln1_b": jnp.zeros((D,), jnp.float32),
        "in_proj_w": 0.02 * jax.random.normal(ks[0], (3 * D, D), jnp.float32),
        "in_proj_b": 0.01 * jax.random.normal(ks[1], (3 * D,), jnp.float32),
        "out_proj_w": 0.02 * jax.random.normal(ks[2], (D, D), jnp.float32),
        "out_proj_b": 0.01 * jax.random.normal(ks[3], (D,), jnp.float32),
        "ln2_w": jnp.ones((D,), jnp.float32),
        "ln2_b": jnp.zeros((D,), jnp.float32),
        "fc_w": 0.02 * jax.random.normal(ks[4], (4 * D, D), jnp.float32),
        "fc_b": 0.01 * jax.random.normal(ks[5], (4 * D,), jnp.float32),
        "proj_w": 0.02 * jax.random.normal(ks[6], (D, 4 * D), jnp.float32),
        "proj_b": 0.01 * jax.random.normal(ks[7], (D,), jnp.float32),
    }

    def causal_mask(L):
        idx = jnp.arange(L)
        return jnp.where(idx[None, :] > idx[:, None], -jnp.inf, 0.0).astype(jnp.float32)

    # --- config 1: f32 weights, aligned seq-len (tight correctness check) ---
    L, N = 8, 2
    x = jax.random.normal(jax.random.PRNGKey(1), (L, N, D), jnp.float32)
    m = causal_mask(L)
    fwd_f32 = jax.jit(functools.partial(residual_attention_block,
                                        n_head=H, param_dtype=jnp.float32))
    out = jax.block_until_ready(fwd_f32(x, params, m))
    ref = _reference(x, params, m, H)
    assert out.shape == (L, N, D)
    assert jnp.allclose(out, ref, atol=2e-3, rtol=2e-3), "f32 mismatch vs reference"

    # --- config 2: bf16 weights, unaligned seq-len (exercises padding path) ---
    L2, N2 = 7, 2
    x2 = jax.random.normal(jax.random.PRNGKey(2), (L2, N2, D), jnp.float32)
    m2 = causal_mask(L2)
    fwd_bf16 = jax.jit(functools.partial(residual_attention_block,
                                         n_head=H, param_dtype=jnp.bfloat16))
    out2 = jax.block_until_ready(fwd_bf16(x2, params, m2))
    ref2 = _reference(x2, params, m2, H)
    assert out2.shape == (L2, N2, D)
    assert jnp.allclose(out2, ref2, atol=5e-3, rtol=5e-3), "bf16 mismatch vs reference"

    print("KERNEL_OK")
</pallas_src>

<mosaic_0001>
module attributes {stable_mosaic.version = 11 : i64} {
  func.func @_residual_attention_block_kernel(%arg0: i32, %arg1: memref<2x8x32xf32, #tpu.memory_space<vmem>>, %arg2: memref<8x8xf32, #tpu.memory_space<vmem>>, %arg3: memref<1x32xf32, #tpu.memory_space<vmem>>, %arg4: memref<1x32xf32, #tpu.memory_space<vmem>>, %arg5: memref<32x96xf32, #tpu.memory_space<vmem>>, %arg6: memref<1x96xf32, #tpu.memory_space<vmem>>, %arg7: memref<32x32xf32, #tpu.memory_space<vmem>>, %arg8: memref<1x32xf32, #tpu.memory_space<vmem>>, %arg9: memref<1x32xf32, #tpu.memory_space<vmem>>, %arg10: memref<1x32xf32, #tpu.memory_space<vmem>>, %arg11: memref<32x128xf32, #tpu.memory_space<vmem>>, %arg12: memref<1x128xf32, #tpu.memory_space<vmem>>, %arg13: memref<128x32xf32, #tpu.memory_space<vmem>>, %arg14: memref<1x32xf32, #tpu.memory_space<vmem>>, %arg15: memref<2x8x32xf32, #tpu.memory_space<vmem>>) attributes {dimension_semantics = [#tpu.dimension_semantics<parallel>], iteration_bounds = array<i64: 1>, scalar_prefetch = 0 : i64, scratch_operands = 0 : i64, tpu.core_type = #tpu.core_type<tc>, window_params = [{transform_indices = @transform_0, window_bounds = array<i64: 2, 8, 32>}, {pipeline_mode = #tpu.pipeline_mode<synchronous>, transform_indices = @transform_1, window_bounds = array<i64: 8, 8>}, {pipeline_mode = #tpu.pipeline_mode<synchronous>, transform_indices = @transform_2, window_bounds = array<i64: 1, 32>}, {pipeline_mode = #tpu.pipeline_mode<synchronous>, transform_indices = @transform_3, window_bounds = array<i64: 1, 32>}, {pipeline_mode = #tpu.pipeline_mode<synchronous>, transform_indices = @transform_4, window_bounds = array<i64: 32, 96>}, {pipeline_mode = #tpu.pipeline_mode<synchronous>, transform_indices = @transform_5, window_bounds = array<i64: 1, 96>}, {pipeline_mode = #tpu.pipeline_mode<synchronous>, transform_indices = @transform_6, window_bounds = array<i64: 32, 32>}, {pipeline_mode = #tpu.pipeline_mode<synchronous>, transform_indices = @transform_7, window_bounds = array<i64: 1, 32>}, {pipeline_mode = #tpu.pipeline_mode<synchronous>, transform_indices = @transform_8, window_bounds = array<i64: 1, 32>}, {pipeline_mode = #tpu.pipeline_mode<synchronous>, transform_indices = @transform_9, window_bounds = array<i64: 1, 32>}, {pipeline_mode = #tpu.pipeline_mode<synchronous>, transform_indices = @transform_10, window_bounds = array<i64: 32, 128>}, {pipeline_mode = #tpu.pipeline_mode<synchronous>, transform_indices = @transform_11, window_bounds = array<i64: 1, 128>}, {pipeline_mode = #tpu.pipeline_mode<synchronous>, transform_indices = @transform_12, window_bounds = array<i64: 128, 32>}, {pipeline_mode = #tpu.pipeline_mode<synchronous>, transform_indices = @transform_13, window_bounds = array<i64: 1, 32>}, {transform_indices = @transform_14, window_bounds = array<i64: 2, 8, 32>}]} {
    %c0 = arith.constant 0 : index
    %c0_0 = arith.constant 0 : index
    %c0_1 = arith.constant 0 : index
    %0 = vector.load %arg1[%c0, %c0_0, %c0_1] : memref<2x8x32xf32, #tpu.memory_space<vmem>>, vector<2x8x32xf32>
    %1 = vector.shape_cast %0 : vector<2x8x32xf32> to vector<16x32xf32>
    %c0_2 = arith.constant 0 : index
    %c0_3 = arith.constant 0 : index
    %2 = vector.load %arg3[%c0_2, %c0_3] : memref<1x32xf32, #tpu.memory_space<vmem>>, vector<1x32xf32>
    %c0_4 = arith.constant 0 : index
    %c0_5 = arith.constant 0 : index
    %3 = vector.load %arg4[%c0_4, %c0_5] : memref<1x32xf32, #tpu.memory_space<vmem>>, vector<1x32xf32>
    %cst = arith.constant dense<0.000000e+00> : vector<16xf32>
    %4 = vector.multi_reduction <add>, %1, %cst [1] : vector<16x32xf32> to vector<16xf32>
    %5 = vector.shape_cast %4 : vector<16xf32> to vector<16x1xf32>
    %cst_6 = arith.constant 3.200000e+01 : f32
    %6 = vector.broadcast %cst_6 : f32 to vector<16x1xf32>
    %7 = arith.divf %5, %6 : vector<16x1xf32>
    %8 = vector.broadcast %7 : vector<16x1xf32> to vector<16x32xf32>
    %9 = arith.subf %1, %8 : vector<16x32xf32>
    %10 = arith.mulf %9, %9 : vector<16x32xf32>
    %cst_7 = arith.constant dense<0.000000e+00> : vector<16xf32>
    %11 = vector.multi_reduction <add>, %10, %cst_7 [1] : vector<16x32xf32> to vector<16xf32>
    %12 = vector.shape_cast %11 : vector<16xf32> to vector<16x1xf32>
    %cst_8 = arith.constant 3.200000e+01 : f32
    %13 = vector.broadcast %cst_8 : f32 to vector<16x1xf32>
    %14 = arith.divf %12, %13 : vector<16x1xf32>
    %15 = vector.broadcast %7 : vector<16x1xf32> to vector<16x32xf32>
    %16 = arith.subf %1, %15 : vector<16x32xf32>
    %cst_9 = arith.constant 9.99999974E-6 : f32
    %17 = vector.broadcast %cst_9 : f32 to vector<16x1xf32>
    %18 = arith.addf %14, %17 : vector<16x1xf32>
    %19 = math.rsqrt %18 : vector<16x1xf32>
    %20 = vector.broadcast %19 : vector<16x1xf32> to vector<16x32xf32>
    %21 = arith.mulf %16, %20 : vector<16x32xf32>
    %22 = vector.broadcast %2 : vector<1x32xf32> to vector<16x32xf32>
    %23 = arith.mulf %21, %22 : vector<16x32xf32>
    %24 = vector.broadcast %3 : vector<1x32xf32> to vector<16x32xf32>
    %25 = arith.addf %23, %24 : vector<16x32xf32>
    %c0_10 = arith.constant 0 : index
    %c0_11 = arith.constant 0 : index
    %26 = vector.load %arg5[%c0_10, %c0_11] : memref<32x96xf32, #tpu.memory_space<vmem>>, vector<32x96xf32>
    %cst_12 = arith.constant dense<0.000000e+00> : vector<16x96xf32>
    %27 = tpu.matmul %25, %26, %cst_12 {dimension_numbers = #tpu.dot_dimension_numbers<[1], [0], [0], [1], [0, 0, 1, 1], [], []>} : vector<16x32xf32>, vector<32x96xf32>, vector<16x96xf32> -> vector<16x96xf32>
    %c0_13 = arith.constant 0 : index
    %c0_14 = arith.constant 0 : index
    %28 = vector.load %arg6[%c0_13, %c0_14] : memref<1x96xf32, #tpu.memory_space<vmem>>, vector<1x96xf32>
    %29 = vector.broadcast %28 : vector<1x96xf32> to vector<16x96xf32>
    %30 = arith.addf %27, %29 : vector<16x96xf32>
    %31 = vector.extract_strided_slice %30 {offsets = [0, 0], sizes = [16, 8], strides = [1, 1]} : vector<16x96xf32> to vector<16x8xf32>
    %32 = vector.shape_cast %31 : vector<16x8xf32> to vector<2x8x8xf32>
    %33 = vector.extract_strided_slice %30 {offsets = [0, 8], sizes = [16, 8], strides = [1, 1]} : vector<16x96xf32> to vector<16x8xf32>
    %34 = vector.shape_cast %33 : vector<16x8xf32> to vector<2x8x8xf32>
    %35 = vector.extract_strided_slice %30 {offsets = [0, 16], sizes = [16, 8], strides = [1, 1]} : vector<16x96xf32> to vector<16x8xf32>
    %36 = vector.shape_cast %35 : vector<16x8xf32> to vector<2x8x8xf32>
    %37 = vector.extract_strided_slice %30 {offsets = [0, 24], sizes = [16, 8], strides = [1, 1]} : vector<16x96xf32> to vector<16x8xf32>
    %38 = vector.shape_cast %37 : vector<16x8xf32> to vector<2x8x8xf32>
    %39 = tpu.concatenate %32, %34, %36, %38 in 0 : vector<2x8x8xf32>, vector<2x8x8xf32>, vector<2x8x8xf32>, vector<2x8x8xf32> -> vector<8x8x8xf32>
    %40 = vector.extract_strided_slice %30 {offsets = [0, 32], sizes = [16, 8], strides = [1, 1]} : vector<16x96xf32> to vector<16x8xf32>
    %41 = vector.shape_cast %40 : vector<16x8xf32> to vector<2x8x8xf32>
    %42 = vector.extract_strided_slice %30 {offsets = [0, 40], sizes = [16, 8], strides = [1, 1]} : vector<16x96xf32> to vector<16x8xf32>
    %43 = vector.shape_cast %42 : vector<16x8xf32> to vector<2x8x8xf32>
    %44 = vector.extract_strided_slice %30 {offsets = [0, 48], sizes = [16, 8], strides = [1, 1]} : vector<16x96xf32> to vector<16x8xf32>
    %45 = vector.shape_cast %44 : vector<16x8xf32> to vector<2x8x8xf32>
    %46 = vector.extract_strided_slice %30 {offsets = [0, 56], sizes = [16, 8], strides = [1, 1]} : vector<16x96xf32> to vector<16x8xf32>
    %47 = vector.shape_cast %46 : vector<16x8xf32> to vector<2x8x8xf32>
    %48 = tpu.concatenate %41, %43, %45, %47 in 0 : vector<2x8x8xf32>, vector<2x8x8xf32>, vector<2x8x8xf32>, vector<2x8x8xf32> -> vector<8x8x8xf32>
    %49 = vector.extract_strided_slice %30 {offsets = [0, 64], sizes = [16, 8], strides = [1, 1]} : vector<16x96xf32> to vector<16x8xf32>
    %50 = vector.shape_cast %49 : vector<16x8xf32> to vector<2x8x8xf32>
    %51 = vector.extract_strided_slice %30 {offsets = [0, 72], sizes = [16, 8], strides = [1, 1]} : vector<16x96xf32> to vector<16x8xf32>
    %52 = vector.shape_cast %51 : vector<16x8xf32> to vector<2x8x8xf32>
    %53 = vector.extract_strided_slice %30 {offsets = [0, 80], sizes = [16, 8], strides = [1, 1]} : vector<16x96xf32> to vector<16x8xf32>
    %54 = vector.shape_cast %53 : vector<16x8xf32> to vector<2x8x8xf32>
    %55 = vector.extract_strided_slice %30 {offsets = [0, 88], sizes = [16, 8], strides = [1, 1]} : vector<16x96xf32> to vector<16x8xf32>
    %56 = vector.shape_cast %55 : vector<16x8xf32> to vector<2x8x8xf32>
    %57 = tpu.concatenate %50, %52, %54, %56 in 0 : vector<2x8x8xf32>, vector<2x8x8xf32>, vector<2x8x8xf32>, vector<2x8x8xf32> -> vector<8x8x8xf32>
    %c0_15 = arith.constant 0 : index
    %c0_16 = arith.constant 0 : index
    %58 = vector.load %arg2[%c0_15, %c0_16] : memref<8x8xf32, #tpu.memory_space<vmem>>, vector<8x8xf32>
    "tpu.trace_start"() <{level = 10 : i32, message = "bqd,bkd->bqk"}> : () -> ()
    %cst_17 = arith.constant dense<0.000000e+00> : vector<8x8x8xf32>
    %59 = tpu.matmul %39, %48, %cst_17 {dimension_numbers = #tpu.dot_dimension_numbers<[2], [2], [1], [1], [0, 0, 0, 1, 1, 1], [0], [0]>} : vector<8x8x8xf32>, vector<8x8x8xf32>, vector<8x8x8xf32> -> vector<8x8x8xf32>
    "tpu.trace_stop"() : () -> ()
    %60 = vector.shape_cast %58 : vector<8x8xf32> to vector<1x8x8xf32>
    %61 = vector.broadcast %60 : vector<1x8x8xf32> to vector<8x8x8xf32>
    %62 = arith.addf %59, %61 : vector<8x8x8xf32>
    %cst_18 = arith.constant dense<0xFF800000> : vector<8x8xf32>
    %63 = vector.multi_reduction <maximumf>, %62, %cst_18 [2] : vector<8x8x8xf32> to vector<8x8xf32>
    %64 = vector.shape_cast %63 : vector<8x8xf32> to vector<8x8x1xf32>
    %65 = vector.broadcast %64 : vector<8x8x1xf32> to vector<8x8x8xf32>
    %66 = arith.subf %62, %65 : vector<8x8x8xf32>
    %67 = math.exp %66 : vector<8x8x8xf32>
    %cst_19 = arith.constant dense<0.000000e+00> : vector<8x8xf32>
    %68 = vector.multi_reduction <add>, %67, %cst_19 [2] : vector<8x8x8xf32> to vector<8x8xf32>
    %69 = vector.shape_cast %68 : vector<8x8xf32> to vector<8x8x1xf32>
    %70 = vector.broadcast %69 : vector<8x8x1xf32> to vector<8x8x8xf32>
    %71 = arith.divf %67, %70 : vector<8x8x8xf32>
    "tpu.trace_start"() <{level = 10 : i32, message = "bqk,bkd->bqd"}> : () -> ()
    %cst_20 = arith.constant dense<0.000000e+00> : vector<8x8x8xf32>
    %72 = tpu.matmul %71, %57, %cst_20 {dimension_numbers = #tpu.dot_dimension_numbers<[2], [1], [1], [2], [0, 0, 0, 1, 1, 2], [0], [0]>} : vector<8x8x8xf32>, vector<8x8x8xf32>, vector<8x8x8xf32> -> vector<8x8x8xf32>
    "tpu.trace_stop"() : () -> ()
    %73 = vector.extract_strided_slice %72 {offsets = [0, 0, 0], sizes = [2, 8, 8], strides = [1, 1, 1]} : vector<8x8x8xf32> to vector<2x8x8xf32>
    %74 = vector.extract_strided_slice %72 {offsets = [2, 0, 0], sizes = [2, 8, 8], strides = [1, 1, 1]} : vector<8x8x8xf32> to vector<2x8x8xf32>
    %75 = vector.extract_strided_slice %72 {offsets = [4, 0, 0], sizes = [2, 8, 8], strides = [1, 1, 1]} : vector<8x8x8xf32> to vector<2x8x8xf32>
    %76 = vector.extract_strided_slice %72 {offsets = [6, 0, 0], sizes = [2, 8, 8], strides = [1, 1, 1]} : vector<8x8x8xf32> to vector<2x8x8xf32>
    %77 = tpu.concatenate %73, %74, %75, %76 in 2 : vector<2x8x8xf32>, vector<2x8x8xf32>, vector<2x8x8xf32>, vector<2x8x8xf32> -> vector<2x8x32xf32>
    %78 = vector.shape_cast %77 : vector<2x8x32xf32> to vector<16x32xf32>
    %c0_21 = arith.constant 0 : index
    %c0_22 = arith.constant 0 : index
    %79 = vector.load %arg7[%c0_21, %c0_22] : memref<32x32xf32, #tpu.memory_space<vmem>>, vector<32x32xf32>
    %cst_23 = arith.constant dense<0.000000e+00> : vector<16x32xf32>
    %80 = tpu.matmul %78, %79, %cst_23 {dimension_numbers = #tpu.dot_dimension_numbers<[1], [0], [0], [1], [0, 0, 1, 1], [], []>} : vector<16x32xf32>, vector<32x32xf32>, vector<16x32xf32> -> vector<16x32xf32>
    %c0_24 = arith.constant 0 : index
    %c0_25 = arith.constant 0 : index
    %81 = vector.load %arg8[%c0_24, %c0_25] : memref<1x32xf32, #tpu.memory_space<vmem>>, vector<1x32xf32>
    %82 = vector.broadcast %81 : vector<1x32xf32> to vector<16x32xf32>
    %83 = arith.addf %80, %82 : vector<16x32xf32>
    %84 = arith.addf %1, %83 : vector<16x32xf32>
    %c0_26 = arith.constant 0 : index
    %c0_27 = arith.constant 0 : index
    %85 = vector.load %arg9[%c0_26, %c0_27] : memref<1x32xf32, #tpu.memory_space<vmem>>, vector<1x32xf32>
    %c0_28 = arith.constant 0 : index
    %c0_29 = arith.constant 0 : index
    %86 = vector.load %arg10[%c0_28, %c0_29] : memref<1x32xf32, #tpu.memory_space<vmem>>, vector<1x32xf32>
    %cst_30 = arith.constant dense<0.000000e+00> : vector<16xf32>
    %87 = vector.multi_reduction <add>, %84, %cst_30 [1] : vector<16x32xf32> to vector<16xf32>
    %88 = vector.shape_cast %87 : vector<16xf32> to vector<16x1xf32>
    %cst_31 = arith.constant 3.200000e+01 : f32
    %89 = vector.broadcast %cst_31 : f32 to vector<16x1xf32>
    %90 = arith.divf %88, %89 : vector<16x1xf32>
    %91 = vector.broadcast %90 : vector<16x1xf32> to vector<16x32xf32>
    %92 = arith.subf %84, %91 : vector<16x32xf32>
    %93 = arith.mulf %92, %92 : vector<16x32xf32>
    %cst_32 = arith.constant dense<0.000000e+00> : vector<16xf32>
    %94 = vector.multi_reduction <add>, %93, %cst_32 [1] : vector<16x32xf32> to vector<16xf32>
    %95 = vector.shape_cast %94 : vector<16xf32> to vector<16x1xf32>
    %cst_33 = arith.constant 3.200000e+01 : f32
    %96 = vector.broadcast %cst_33 : f32 to vector<16x1xf32>
    %97 = arith.divf %95, %96 : vector<16x1xf32>
    %98 = vector.broadcast %90 : vector<16x1xf32> to vector<16x32xf32>
    %99 = arith.subf %84, %98 : vector<16x32xf32>
    %cst_34 = arith.constant 9.99999974E-6 : f32
    %100 = vector.broadcast %cst_34 : f32 to vector<16x1xf32>
    %101 = arith.addf %97, %100 : vector<16x1xf32>
    %102 = math.rsqrt %101 : vector<16x1xf32>
    %103 = vector.broadcast %102 : vector<16x1xf32> to vector<16x32xf32>
    %104 = arith.mulf %99, %103 : vector<16x32xf32>
    %105 = vector.broadcast %85 : vector<1x32xf32> to vector<16x32xf32>
    %106 = arith.mulf %104, %105 : vector<16x32xf32>
    %107 = vector.broadcast %86 : vector<1x32xf32> to vector<16x32xf32>
    %108 = arith.addf %106, %107 : vector<16x32xf32>
    %c0_35 = arith.constant 0 : index
    %c0_36 = arith.constant 0 : index
    %109 = vector.load %arg11[%c0_35, %c0_36] : memref<32x128xf32, #tpu.memory_space<vmem>>, vector<32x128xf32>
    %cst_37 = arith.constant dense<0.000000e+00> : vector<16x128xf32>
    %110 = tpu.matmul %108, %109, %cst_37 {dimension_numbers = #tpu.dot_dimension_numbers<[1], [0], [0], [1], [0, 0, 1, 1], [], []>} : vector<16x32xf32>, vector<32x128xf32>, vector<16x128xf32> -> vector<16x128xf32>
    %c0_38 = arith.constant 0 : index
    %c0_39 = arith.constant 0 : index
    %111 = vector.load %arg12[%c0_38, %c0_39] : memref<1x128xf32, #tpu.memory_space<vmem>>, vector<1x128xf32>
    %112 = vector.broadcast %111 : vector<1x128xf32> to vector<16x128xf32>
    %113 = arith.addf %110, %112 : vector<16x128xf32>
    %cst_40 = arith.constant 1.702000e+00 : f32
    %114 = vector.broadcast %cst_40 : f32 to vector<16x128xf32>
    %115 = arith.mulf %114, %113 : vector<16x128xf32>
    %116 = arith.negf %115 : vector<16x128xf32>
    %117 = math.exp %116 : vector<16x128xf32>
    %cst_41 = arith.constant 1.000000e+00 : f32
    %118 = vector.broadcast %cst_41 : f32 to vector<16x128xf32>
    %119 = arith.addf %118, %117 : vector<16x128xf32>
    %120 = arith.divf %118, %119 : vector<16x128xf32>
    %121 = arith.mulf %113, %120 : vector<16x128xf32>
    %c0_42 = arith.constant 0 : index
    %c0_43 = arith.constant 0 : index
    %122 = vector.load %arg13[%c0_42, %c0_43] : memref<128x32xf32, #tpu.memory_space<vmem>>, vector<128x32xf32>
    %cst_44 = arith.constant dense<0.000000e+00> : vector<16x32xf32>
    %123 = tpu.matmul %121, %122, %cst_44 {dimension_numbers = #tpu.dot_dimension_numbers<[1], [0], [0], [1], [0, 0, 1, 1], [], []>} : vector<16x128xf32>, vector<128x32xf32>, vector<16x32xf32> -> vector<16x32xf32>
    %c0_45 = arith.constant 0 : index
    %c0_46 = arith.constant 0 : index
    %124 = vector.load %arg14[%c0_45, %c0_46] : memref<1x32xf32, #tpu.memory_space<vmem>>, vector<1x32xf32>
    %125 = vector.broadcast %124 : vector<1x32xf32> to vector<16x32xf32>
    %126 = arith.addf %123, %125 : vector<16x32xf32>
    %127 = arith.addf %84, %126 : vector<16x32xf32>
    %128 = vector.shape_cast %127 : vector<16x32xf32> to vector<2x8x32xf32>
    %c0_47 = arith.constant 0 : index
    %c0_48 = arith.constant 0 : index
    %c0_49 = arith.constant 0 : index
    %129 = vector.load %arg15[%c0_47, %c0_48, %c0_49] : memref<2x8x32xf32, #tpu.memory_space<vmem>>, vector<2x8x32xf32>
    tpu.vector_store %arg15[%c0_47, %c0_48, %c0_49], %128 {strides = array<i32>} : memref<2x8x32xf32, #tpu.memory_space<vmem>>, vector<2x8x32xf32>,
    return
  }
  func.func @transform_0(%arg0: i32) -> (i32, i32, i32) {
    %c0_i32 = arith.constant 0 : i32
    %c0_i32_0 = arith.constant 0 : i32
    %c0_i32_1 = arith.constant 0 : i32
    return %arg0, %c0_i32, %c0_i32_0 : i32, i32, i32
  }
  func.func @transform_1(%arg0: i32) -> (i32, i32) {
    %c0_i32 = arith.constant 0 : i32
    %c0_i32_0 = arith.constant 0 : i32
    %c0_i32_1 = arith.constant 0 : i32
    return %c0_i32, %c0_i32_0 : i32, i32
  }
  func.func @transform_2(%arg0: i32) -> (i32, i32) {
    %c0_i32 = arith.constant 0 : i32
    %c0_i32_0 = arith.constant 0 : i32
    %c0_i32_1 = arith.constant 0 : i32
    return %c0_i32, %c0_i32_0 : i32, i32
  }
  func.func @transform_3(%arg0: i32) -> (i32, i32) {
    %c0_i32 = arith.constant 0 : i32
    %c0_i32_0 = arith.constant 0 : i32
    %c0_i32_1 = arith.constant 0 : i32
    return %c0_i32, %c0_i32_0 : i32, i32
  }
  func.func @transform_4(%arg0: i32) -> (i32, i32) {
    %c0_i32 = arith.constant 0 : i32
    %c0_i32_0 = arith.constant 0 : i32
    %c0_i32_1 = arith.constant 0 : i32
    return %c0_i32, %c0_i32_0 : i32, i32
  }
  func.func @transform_5(%arg0: i32) -> (i32, i32) {
    %c0_i32 = arith.constant 0 : i32
    %c0_i32_0 = arith.constant 0 : i32
    %c0_i32_1 = arith.constant 0 : i32
    return %c0_i32, %c0_i32_0 : i32, i32
  }
  func.func @transform_6(%arg0: i32) -> (i32, i32) {
    %c0_i32 = arith.constant 0 : i32
    %c0_i32_0 = arith.constant 0 : i32
    %c0_i32_1 = arith.constant 0 : i32
    return %c0_i32, %c0_i32_0 : i32, i32
  }
  func.func @transform_7(%arg0: i32) -> (i32, i32) {
    %c0_i32 = arith.constant 0 : i32
    %c0_i32_0 = arith.constant 0 : i32
    %c0_i32_1 = arith.constant 0 : i32
    return %c0_i32, %c0_i32_0 : i32, i32
  }
  func.func @transform_8(%arg0: i32) -> (i32, i32) {
    %c0_i32 = arith.constant 0 : i32
    %c0_i32_0 = arith.constant 0 : i32
    %c0_i32_1 = arith.constant 0 : i32
    return %c0_i32, %c0_i32_0 : i32, i32
  }
  func.func @transform_9(%arg0: i32) -> (i32, i32) {
    %c0_i32 = arith.constant 0 : i32
    %c0_i32_0 = arith.constant 0 : i32
    %c0_i32_1 = arith.constant 0 : i32
    return %c0_i32, %c0_i32_0 : i32, i32
  }
  func.func @transform_10(%arg0: i32) -> (i32, i32) {
    %c0_i32 = arith.constant 0 : i32
    %c0_i32_0 = arith.constant 0 : i32
    %c0_i32_1 = arith.constant 0 : i32
    return %c0_i32, %c0_i32_0 : i32, i32
  }
  func.func @transform_11(%arg0: i32) -> (i32, i32) {
    %c0_i32 = arith.constant 0 : i32
    %c0_i32_0 = arith.constant 0 : i32
    %c0_i32_1 = arith.constant 0 : i32
    return %c0_i32, %c0_i32_0 : i32, i32
  }
  func.func @transform_12(%arg0: i32) -> (i32, i32) {
    %c0_i32 = arith.constant 0 : i32
    %c0_i32_0 = arith.constant 0 : i32
    %c0_i32_1 = arith.constant 0 : i32
    return %c0_i32, %c0_i32_0 : i32, i32
  }
  func.func @transform_13(%arg0: i32) -> (i32, i32) {
    %c0_i32 = arith.constant 0 : i32
    %c0_i32_0 = arith.constant 0 : i32
    %c0_i32_1 = arith.constant 0 : i32
    return %c0_i32, %c0_i32_0 : i32, i32
  }
  func.func @transform_14(%arg0: i32) -> (i32, i32, i32) {
    %c0_i32 = arith.constant 0 : i32
    %c0_i32_0 = arith.constant 0 : i32
    %c0_i32_1 = arith.constant 0 : i32
    return %arg0, %c0_i32, %c0_i32_0 : i32, i32, i32
  }
}

</mosaic_0001>

<llo_original>
// kernel: residual_attention_block.1
$region0: #{residual_attention_block.1}
  #allocation0 [shape = 'u32[]', space=smem, size = 0x4, offset = 0x4, fixed_abs, tag = 'smem constant byte address 0x4 - core index']
  #allocation1 [shape = 'u32[144,128]{1,0:T(1,128)}', space=vmem, size = 0x12000, scoped, tag = 'internal scratch']
  %s0 = inlined_call_operand.vmem [shape: f32[2,8,32], index: 0, kind: input, shape index: {}]
  %s1 = inlined_call_operand.vmem [shape: f32[8,8], index: 1, kind: input, shape index: {}]
  %s2 = inlined_call_operand.vmem [shape: f32[1,32], index: 2, kind: input, shape index: {}]
  %s3 = inlined_call_operand.vmem [shape: f32[1,32], index: 3, kind: input, shape index: {}]
  %s4 = inlined_call_operand.vmem [shape: f32[32,96], index: 4, kind: input, shape index: {}]
  %s5 = inlined_call_operand.vmem [shape: f32[1,96], index: 5, kind: input, shape index: {}]
  %s6 = inlined_call_operand.vmem [shape: f32[32,32], index: 6, kind: input, shape index: {}]
  %s7 = inlined_call_operand.vmem [shape: f32[1,32], index: 7, kind: input, shape index: {}]
  %s8 = inlined_call_operand.vmem [shape: f32[1,32], index: 8, kind: input, shape index: {}]
  %s9 = inlined_call_operand.vmem [shape: f32[1,32], index: 9, kind: input, shape index: {}]
  %s10 = inlined_call_operand.vmem [shape: f32[32,128], index: 10, kind: input, shape index: {}]
  %s11 = inlined_call_operand.vmem [shape: f32[1,128], index: 11, kind: input, shape index: {}]
  %s12 = inlined_call_operand.vmem [shape: f32[128,32], index: 12, kind: input, shape index: {}]
  %s13 = inlined_call_operand.vmem [shape: f32[1,32], index: 13, kind: input, shape index: {}]
  %s14 = inlined_call_operand.vmem [shape: f32[2,8,32], index: 14, kind: output, shape index: {}]
  %s15 = sld [smem:[#allocation0]]
  $region66: #{residual_attention_block.1} parent=0
    _
  %s17 = ssub.s32 1, %s15
  %s18 = scalar_select 0, %s17, %s15
  // Predicated region
  $region2: #{residual_attention_block.1} parent=0 // pred_check
    _
  $region3: #{residual_attention_block.1} parent=0 // pred_check_branch
    %20 = sbr.rel (0) target = $region5
  $region4: #{residual_attention_block.1} parent=0 // pred_region
    _
  $region5: #{residual_attention_block.1} parent=0 // pred_fallthru
    _
  // Predicated region
  $region6: #{residual_attention_block.1} parent=0 // pred_check
    _
  $region7: #{residual_attention_block.1} parent=0 // pred_check_branch
    %22 = sbr.rel (0) target = $region9
  $region8: #{residual_attention_block.1} parent=0 // pred_region
    _
  $region9: #{residual_attention_block.1} parent=0 // pred_fallthru
    _
  // Predicated region
  $region10: #{residual_attention_block.1} parent=0 // pred_check
    _
  $region11: #{residual_attention_block.1} parent=0 // pred_check_branch
    %24 = sbr.rel (0) target = $region13
  $region12: #{residual_attention_block.1} parent=0 // pred_region
    _
  $region13: #{residual_attention_block.1} parent=0 // pred_fallthru
    _
  // Predicated region
  $region14: #{residual_attention_block.1} parent=0 // pred_check
    _
  $region15: #{residual_attention_block.1} parent=0 // pred_check_branch
    %26 = sbr.rel (0) target = $region17
  $region16: #{residual_attention_block.1} parent=0 // pred_region
    _
  $region17: #{residual_attention_block.1} parent=0 // pred_fallthru
    _
  // Predicated region
  $region18: #{residual_attention_block.1} parent=0 // pred_check
    _
  $region19: #{residual_attention_block.1} parent=0 // pred_check_branch
    %28 = sbr.rel (0) target = $region21
  $region20: #{residual_attention_block.1} parent=0 // pred_region
    _
  $region21: #{residual_attention_block.1} parent=0 // pred_fallthru
    _
  // Predicated region
  $region22: #{residual_attention_block.1} parent=0 // pred_check
    _
  $region23: #{residual_attention_block.1} parent=0 // pred_check_branch
    %30 = sbr.rel (0) target = $region25
  $region24: #{residual_attention_block.1} parent=0 // pred_region
    _
  $region25: #{residual_attention_block.1} parent=0 // pred_fallthru
    _
  // Predicated region
  $region26: #{residual_attention_block.1} parent=0 // pred_check
    _
  $region27: #{residual_attention_block.1} parent=0 // pred_check_branch
    %32 = sbr.rel (0) target = $region29
  $region28: #{residual_attention_block.1} parent=0 // pred_region
    _
  $region29: #{residual_attention_block.1} parent=0 // pred_fallthru
    _
  // Predicated region
  $region30: #{residual_attention_block.1} parent=0 // pred_check
    _
  $region31: #{residual_attention_block.1} parent=0 // pred_check_branch
    %34 = sbr.rel (0) target = $region33
  $region32: #{residual_attention_block.1} parent=0 // pred_region
    _
  $region33: #{residual_attention_block.1} parent=0 // pred_fallthru
    _
  // Predicated region
  $region34: #{residual_attention_block.1} parent=0 // pred_check
    _
  $region35: #{residual_attention_block.1} parent=0 // pred_check_branch
    %36 = sbr.rel (0) target = $region37
  $region36: #{residual_attention_block.1} parent=0 // pred_region
    _
  $region37: #{residual_attention_block.1} parent=0 // pred_fallthru
    _
  // Predicated region
  $region38: #{residual_attention_block.1} parent=0 // pred_check
    _
  $region39: #{residual_attention_block.1} parent=0 // pred_check_branch
    %38 = sbr.rel (0) target = $region41
  $region40: #{residual_attention_block.1} parent=0 // pred_region
    _
  $region41: #{residual_attention_block.1} parent=0 // pred_fallthru
    _
  // Predicated region
  $region42: #{residual_attention_block.1} parent=0 // pred_check
    _
  $region43: #{residual_attention_block.1} parent=0 // pred_check_branch
    %40 = sbr.rel (0) target = $region45
  $region44: #{residual_attention_block.1} parent=0 // pred_region
    _
  $region45: #{residual_attention_block.1} parent=0 // pred_fallthru
    _
  // Predicated region
  $region46: #{residual_attention_block.1} parent=0 // pred_check
    _
  $region47: #{residual_attention_block.1} parent=0 // pred_check_branch
    %42 = sbr.rel (0) target = $region49
  $region48: #{residual_attention_block.1} parent=0 // pred_region
    _
  $region49: #{residual_attention_block.1} parent=0 // pred_fallthru
    _
  // Predicated region
  $region50: #{residual_attention_block.1} parent=0 // pred_check
    _
  $region51: #{residual_attention_block.1} parent=0 // pred_check_branch
    %44 = sbr.rel (0) target = $region53
  $region52: #{residual_attention_block.1} parent=0 // pred_region
    _
  $region53: #{residual_attention_block.1} parent=0 // pred_fallthru
    _
  // Predicated region
  $region54: #{residual_attention_block.1} parent=0 // pred_check
    _
  $region55: #{residual_attention_block.1} parent=0 // pred_check_branch
    %46 = sbr.rel (0) target = $region57
  $region56: #{residual_attention_block.1} parent=0 // pred_region
    _
  $region57: #{residual_attention_block.1} parent=0 // pred_fallthru
    _
  %v47 = vld [vmem:[%s0] sm:$0xff]
  %v48 = vld [vmem:[%s0 + $0x8] sm:$0xff]
  %v49 = vld [vmem:[%s2] sm:$0x1]
  %v50 = vld [vmem:[%s3] sm:$0x1]
  %vm51 = vcmask 261120
  %v52 = vsel %vm51, %v47, 0.0
  %53 = vadd.xlane.f32.xlu0 %v52
  %v54 = vpop.xlane.xlu0 %53
  %v55 = vsel %vm51, %v48, 0.0
  %56 = vadd.xlane.f32.xlu0 %v55
  %v57 = vpop.xlane.xlu0 %56
  %v58 = vrcp.pop 32.0
  %v59 = vmul.f32 %v54, %v58
  %v60 = vmul.f32 %v57, %v58
  %v61 = vsub.f32 %v47, %v59
  %v62 = vsub.f32 %v48, %v60
  %v63 = vmul.f32 %v61, %v61
  %v64 = vmul.f32 %v62, %v62
  %v65 = vsel %vm51, %v63, 0.0
  %66 = vadd.xlane.f32.xlu0 %v65
  %v67 = vpop.xlane.xlu0 %66
  %v68 = vsel %vm51, %v64, 0.0
  %69 = vadd.xlane.f32.xlu0 %v68
  %v70 = vpop.xlane.xlu0 %69
  %v71 = vmul.f32 %v67, %v58
  %v72 = vmul.f32 %v70, %v58
  %v73 = vadd.f32 %v71, 1e-05
  %v74 = vadd.f32 %v72, 1e-05
  %v75 = vrsqrt.pop %v73
  %v76 = vrsqrt.pop %v74
  %v77 = vmul.f32 %v61, %v75
  %v78 = vmul.f32 %v62, %v76
  %v80 = vlaneseq
  %v81 = vshrl.u32 %v80, 7
  %v82 = vsub.s32 0, %v81
  %v83 = vrot.slane %v49, %v82
  %v85 = vmul.f32 %v77, %v83
  %v86 = vmul.f32 %v78, %v83
  %v88 = vlaneseq
  %v89 = vshrl.u32 %v88, 7
  %v90 = vsub.s32 0, %v89
  %v91 = vrot.slane %v50, %v90
  %v93 = vadd.f32 %v85, %v91
  %v94 = vadd.f32 %v86, %v91
  %v95 = vld [vmem:[%s4] sm:$0xff]
  %v96 = vld [vmem:[%s4 + $0x8] sm:$0xff]
  %v97 = vld [vmem:[%s4 + $0x10] sm:$0xff]
  %v98 = vld [vmem:[%s4 + $0x18] sm:$0xff]
  %v99 = vld [vmem:[%s5] sm:$0x1]
  %v101 = vlaneseq
  %v102 = vshrl.u32 %v101, 7
  %v103 = vsub.s32 0, %v102
  %v104 = vrot.slane %v99, %v103
  %v107 = vsel %vm51, %v93, 0
  %v110 = vsel %vm51, %v94, 0
  %112 = vmatprep.subr.mxu0 0.0
  %113 = vmatpush1.msra.mxu0 %v95
  %114 = vmatprep.subr.mxu0 0.0
  %115 = vmatpush1.msra.mxu0 %v96
  %116 = vmatprep.subr.mxu0 0.0
  %117 = vmatpush1.msra.mxu0 %v97
  %118 = vmatprep.subr.mxu0 0.0
  %119 = vmatpush1.msra.mxu0 %v98
  %120 = vmatprep.subr.mxu0 0.0
  %121 = vmatpush1.msra.mxu0 0.0
  %122 = vmatprep.subr.mxu0 0.0
  %123 = vmatpush1.msra.mxu0 0.0
  %124 = vmatprep.subr.mxu0 0.0
  %125 = vmatpush1.msra.mxu0 0.0
  %126 = vmatprep.subr.mxu0 0.0
  %127 = vmatpush1.msra.mxu0 0.0
  %128 = vmatprep.subr.mxu0 0.0
  %129 = vmatpush1.msra.mxu0 0.0
  %130 = vmatprep.subr.mxu0 0.0
  %131 = vmatpush1.msra.mxu0 0.0
  %132 = vmatprep.subr.mxu0 0.0
  %133 = vmatpush1.msra.mxu0 0.0
  %134 = vmatprep.subr.mxu0 0.0
  %135 = vmatpush1.msra.mxu0 0.0
  %136 = vmatprep.subr.mxu0 0.0
  %137 = vmatpush1.msra.mxu0 0.0
  %138 = vmatprep.subr.mxu0 0.0
  %139 = vmatpush1.msra.mxu0 0.0
  %140 = vmatprep.subr.mxu0 0.0
  %141 = vmatpush1.msra.mxu0 0.0
  %142 = vmatprep.subr.mxu0 0.0
  %143 = vmatpush1.msra.mxu0 0.0
  %144 = vmatprep.subr.mxu0 0.0
  %145 = vmatpush1.msra.mxu0 0.0
  %146 = vmatprep.subr.mxu0 0.0
  %147 = vmatpush1.msra.mxu0 0.0
  %148 = vmatprep.subr.mxu0 0.0
  %149 = vmatpush1.msra.mxu0 0.0
  %150 = vmatprep.subr.mxu0 0.0
  %151 = vmatpush1.msra.mxu0 0.0
  %152 = vmatprep.subr.mxu0 0.0
  %153 = vmatpush1.msra.mxu0 0.0
  %154 = vmatprep.subr.mxu0 0.0
  %155 = vmatpush1.msra.mxu0 0.0
  %156 = vmatprep.subr.mxu0 0.0
  %157 = vmatpush1.msra.mxu0 0.0
  %158 = vmatprep.subr.mxu0 0.0
  %159 = vmatpush1.msra.mxu0 0.0
  %160 = vmatprep.subr.mxu0 0.0
  %161 = vmatpush1.msra.mxu0 0.0
  %162 = vmatprep.subr.mxu0 0.0
  %163 = vmatpush1.msra.mxu0 0.0
  %164 = vmatprep.subr.mxu0 0.0
  %165 = vmatpush1.msra.mxu0 0.0
  %166 = vmatprep.subr.mxu0 0.0
  %167 = vmatpush1.msra.mxu0 0.0
  %168 = vmatprep.subr.mxu0 0.0
  %169 = vmatpush1.msra.mxu0 0.0
  %170 = vmatprep.subr.mxu0 0.0
  %171 = vmatpush1.msra.mxu0 0.0
  %172 = vmatprep.subr.mxu0 0.0
  %173 = vmatpush1.msra.mxu0 0.0
  %174 = vmatprep.subr.mxu0 0.0
  %175 = vmatpush1.msra.mxu0 0.0
  %176 = vmatprep.mubr.f32.mxu0 0.0
  %177 = vmatmul.mubr.f32.gmra.mrb[0].mxu0 %v107
  %v178 = vpop.f32.mrb[0].mxu0
  %v179 = vadd.f32 %v104, %v178
  %v180 = vpop.f32.mrb[0].mxu0
  %181 = vmatprep.mubr.f32.mxu0 0.0
  %182 = vmatmul.mubr.f32.gmra.mrb[0].mxu0 %v110
  %v183 = vpop.f32.mrb[0].mxu0
  %v184 = vadd.f32 %v104, %v183
  %v185 = vpop.f32.mrb[0].mxu0
  %186 = vdwg.mxu0
  %189 = vrot.lane.b32.xlu0 %v179, 120
  %v190 = vpop.permute.xlu0 %189
  %191 = vrot.lane.b32.xlu0 %v184, 120
  %v192 = vpop.permute.xlu0 %191
  %193 = vrot.lane.b32.xlu0 %v179, 112
  %v194 = vpop.permute.xlu0 %193
  %195 = vrot.lane.b32.xlu0 %v184, 112
  %v196 = vpop.permute.xlu0 %195
  %197 = vrot.lane.b32.xlu0 %v179, 104
  %v198 = vpop.permute.xlu0 %197
  %199 = vrot.lane.b32.xlu0 %v184, 104
  %v200 = vpop.permute.xlu0 %199
  %v201 = vld [vmem:[%s1] sm:$0xff]
  %202 = vrot.lane.b32.xlu0 %v179, 96
  %v203 = vpop.permute.xlu0 %202
  %vm204 = vcmask 64512
  %v205 = vsel %vm204, %v179, 0
  %v207 = vsel %vm204, %v203, 0
  %209 = vmatprep.subr.mxu0 0.0
  %210 = vmatpush1.xpose.msra.mxu0 %v207
  %211 = vmatprep.subr.mxu0 0.0
  %212 = vmatpush1.xpose.msra.mxu0 0.0
  %213 = vmatprep.subr.mxu0 0.0
  %214 = vmatpush1.xpose.msra.mxu0 0.0
  %215 = vmatprep.subr.mxu0 0.0
  %216 = vmatpush1.xpose.msra.mxu0 0.0
  %217 = vmatprep.subr.mxu0 0.0
  %218 = vmatpush1.xpose.msra.mxu0 0.0
  %219 = vmatprep.subr.mxu0 0.0
  %220 = vmatpush1.xpose.msra.mxu0 0.0
  %221 = vmatprep.subr.mxu0 0.0
  %222 = vmatpush1.xpose.msra.mxu0 0.0
  %223 = vmatprep.subr.mxu0 0.0
  %224 = vmatpush1.xpose.msra.mxu0 0.0
  %225 = vmatprep.subr.mxu0 0.0
  %226 = vmatpush1.xpose.msra.mxu0 0.0
  %227 = vmatprep.subr.mxu0 0.0
  %228 = vmatpush1.xpose.msra.mxu0 0.0
  %229 = vmatprep.subr.mxu0 0.0
  %230 = vmatpush1.xpose.msra.mxu0 0.0
  %231 = vmatprep.subr.mxu0 0.0
  %232 = vmatpush1.xpose.msra.mxu0 0.0
  %233 = vmatprep.subr.mxu0 0.0
  %234 = vmatpush1.xpose.msra.mxu0 0.0
  %235 = vmatprep.subr.mxu0 0.0
  %236 = vmatpush1.xpose.msra.mxu0 0.0
  %237 = vmatprep.subr.mxu0 0.0
  %238 = vmatpush1.xpose.msra.mxu0 0.0
  %239 = vmatprep.subr.mxu0 0.0
  %240 = vmatpush1.xpose.msra.mxu0 0.0
  %241 = vmatprep.subr.mxu0 0.0
  %242 = vmatpush1.xpose.msra.mxu0 0.0
  %243 = vmatprep.subr.mxu0 0.0
  %244 = vmatpush1.xpose.msra.mxu0 0.0
  %245 = vmatprep.subr.mxu0 0.0
  %246 = vmatpush1.xpose.msra.mxu0 0.0
  %247 = vmatprep.subr.mxu0 0.0
  %248 = vmatpush1.xpose.msra.mxu0 0.0
  %249 = vmatprep.subr.mxu0 0.0
  %250 = vmatpush1.xpose.msra.mxu0 0.0
  %251 = vmatprep.subr.mxu0 0.0
  %252 = vmatpush1.xpose.msra.mxu0 0.0
  %253 = vmatprep.subr.mxu0 0.0
  %254 = vmatpush1.xpose.msra.mxu0 0.0
  %255 = vmatprep.subr.mxu0 0.0
  %256 = vmatpush1.xpose.msra.mxu0 0.0
  %257 = vmatprep.subr.mxu0 0.0
  %258 = vmatpush1.xpose.msra.mxu0 0.0
  %259 = vmatprep.subr.mxu0 0.0
  %260 = vmatpush1.xpose.msra.mxu0 0.0
  %261 = vmatprep.subr.mxu0 0.0
  %262 = vmatpush1.xpose.msra.mxu0 0.0
  %263 = vmatprep.subr.mxu0 0.0
  %264 = vmatpush1.xpose.msra.mxu0 0.0
  %265 = vmatprep.subr.mxu0 0.0
  %266 = vmatpush1.xpose.msra.mxu0 0.0
  %267 = vmatprep.subr.mxu0 0.0
  %268 = vmatpush1.xpose.msra.mxu0 0.0
  %269 = vmatprep.subr.mxu0 0.0
  %270 = vmatpush1.xpose.msra.mxu0 0.0
  %271 = vmatprep.subr.mxu0 0.0
  %272 = vmatpush1.xpose.msra.mxu0 0.0
  %273 = vmatprep.mubr.f32.mxu0 0.0
  %274 = vmatmul.mubr.f32.gmra.mrb[0].mxu0 %v205
  %v275 = vpop.f32.mrb[0].mxu0
  %v276 = vadd.f32 %v201, %v275
  %v277 = vpop.f32.mrb[0].mxu0
  %278 = vdwg.mxu0
  %279 = vrot.lane.b32.xlu0 %v184, 96
  %v280 = vpop.permute.xlu0 %279
  %v281 = vsel %vm204, %v184, 0
  %v283 = vsel %vm204, %v280, 0
  %285 = vmatprep.subr.mxu0 0.0
  %286 = vmatpush1.xpose.msra.mxu0 %v283
  %287 = vmatprep.subr.mxu0 0.0
  %288 = vmatpush1.xpose.msra.mxu0 0.0
  %289 = vmatprep.subr.mxu0 0.0
  %290 = vmatpush1.xpose.msra.mxu0 0.0
  %291 = vmatprep.subr.mxu0 0.0
  %292 = vmatpush1.xpose.msra.mxu0 0.0
  %293 = vmatprep.subr.mxu0 0.0
  %294 = vmatpush1.xpose.msra.mxu0 0.0
  %295 = vmatprep.subr.mxu0 0.0
  %296 = vmatpush1.xpose.msra.mxu0 0.0
  %297 = vmatprep.subr.mxu0 0.0
  %298 = vmatpush1.xpose.msra.mxu0 0.0
  %299 = vmatprep.subr.mxu0 0.0
  %300 = vmatpush1.xpose.msra.mxu0 0.0
  %301 = vmatprep.subr.mxu0 0.0
  %302 = vmatpush1.xpose.msra.mxu0 0.0
  %303 = vmatprep.subr.mxu0 0.0
  %304 = vmatpush1.xpose.msra.mxu0 0.0
  %305 = vmatprep.subr.mxu0 0.0
  %306 = vmatpush1.xpose.msra.mxu0 0.0
  %307 = vmatprep.subr.mxu0 0.0
  %308 = vmatpush1.xpose.msra.mxu0 0.0
  %309 = vmatprep.subr.mxu0 0.0
  %310 = vmatpush1.xpose.msra.mxu0 0.0
  %311 = vmatprep.subr.mxu0 0.0
  %312 = vmatpush1.xpose.msra.mxu0 0.0
  %313 = vmatprep.subr.mxu0 0.0
  %314 = vmatpush1.xpose.msra.mxu0 0.0
  %315 = vmatprep.subr.mxu0 0.0
  %316 = vmatpush1.xpose.msra.mxu0 0.0
  %317 = vmatprep.subr.mxu0 0.0
  %318 = vmatpush1.xpose.msra.mxu0 0.0
  %319 = vmatprep.subr.mxu0 0.0
  %320 = vmatpush1.xpose.msra.mxu0 0.0
  %321 = vmatprep.subr.mxu0 0.0
  %322 = vmatpush1.xpose.msra.mxu0 0.0
  %323 = vmatprep.subr.mxu0 0.0
  %324 = vmatpush1.xpose.msra.mxu0 0.0
  %325 = vmatprep.subr.mxu0 0.0
  %326 = vmatpush1.xpose.msra.mxu0 0.0
  %327 = vmatprep.subr.mxu0 0.0
  %328 = vmatpush1.xpose.msra.mxu0 0.0
  %329 = vmatprep.subr.mxu0 0.0
  %330 = vmatpush1.xpose.msra.mxu0 0.0
  %331 = vmatprep.subr.mxu0 0.0
  %332 = vmatpush1.xpose.msra.mxu0 0.0
  %333 = vmatprep.subr.mxu0 0.0
  %334 = vmatpush1.xpose.msra.mxu0 0.0
  %335 = vmatprep.subr.mxu0 0.0
  %336 = vmatpush1.xpose.msra.mxu0 0.0
  %337 = vmatprep.subr.mxu0 0.0
  %338 = vmatpush1.xpose.msra.mxu0 0.0
  %339 = vmatprep.subr.mxu0 0.0
  %340 = vmatpush1.xpose.msra.mxu0 0.0
  %341 = vmatprep.subr.mxu0 0.0
  %342 = vmatpush1.xpose.msra.mxu0 0.0
  %343 = vmatprep.subr.mxu0 0.0
  %344 = vmatpush1.xpose.msra.mxu0 0.0
  %345 = vmatprep.subr.mxu0 0.0
  %346 = vmatpush1.xpose.msra.mxu0 0.0
  %347 = vmatprep.subr.mxu0 0.0
  %348 = vmatpush1.xpose.msra.mxu0 0.0
  %349 = vmatprep.mubr.f32.mxu0 0.0
  %350 = vmatmul.mubr.f32.gmra.mrb[0].mxu0 %v281
  %v351 = vpop.f32.mrb[0].mxu0
  %v352 = vadd.f32 %v201, %v351
  %v353 = vpop.f32.mrb[0].mxu0
  %354 = vdwg.mxu0
  %355 = vrot.lane.b32.xlu0 %v190, 96
  %v356 = vpop.permute.xlu0 %355
  %v357 = vsel %vm204, %v190, 0
  %v359 = vsel %vm204, %v356, 0
  %361 = vmatprep.subr.mxu0 0.0
  %362 = vmatpush1.xpose.msra.mxu0 %v359
  %363 = vmatprep.subr.mxu0 0.0
  %364 = vmatpush1.xpose.msra.mxu0 0.0
  %365 = vmatprep.subr.mxu0 0.0
  %366 = vmatpush1.xpose.msra.mxu0 0.0
  %367 = vmatprep.subr.mxu0 0.0
  %368 = vmatpush1.xpose.msra.mxu0 0.0
  %369 = vmatprep.subr.mxu0 0.0
  %370 = vmatpush1.xpose.msra.mxu0 0.0
  %371 = vmatprep.subr.mxu0 0.0
  %372 = vmatpush1.xpose.msra.mxu0 0.0
  %373 = vmatprep.subr.mxu0 0.0
  %374 = vmatpush1.xpose.msra.mxu0 0.0
  %375 = vmatprep.subr.mxu0 0.0
  %376 = vmatpush1.xpose.msra.mxu0 0.0
  %377 = vmatprep.subr.mxu0 0.0
  %378 = vmatpush1.xpose.msra.mxu0 0.0
  %379 = vmatprep.subr.mxu0 0.0
  %380 = vmatpush1.xpose.msra.mxu0 0.0
  %381 = vmatprep.subr.mxu0 0.0
  %382 = vmatpush1.xpose.msra.mxu0 0.0
  %383 = vmatprep.subr.mxu0 0.0
  %384 = vmatpush1.xpose.msra.mxu0 0.0
  %385 = vmatprep.subr.mxu0 0.0
  %386 = vmatpush1.xpose.msra.mxu0 0.0
  %387 = vmatprep.subr.mxu0 0.0
  %388 = vmatpush1.xpose.msra.mxu0 0.0
  %389 = vmatprep.subr.mxu0 0.0
  %390 = vmatpush1.xpose.msra.mxu0 0.0
  %391 = vmatprep.subr.mxu0 0.0
  %392 = vmatpush1.xpose.msra.mxu0 0.0
  %393 = vmatprep.subr.mxu0 0.0
  %394 = vmatpush1.xpose.msra.mxu0 0.0
  %395 = vmatprep.subr.mxu0 0.0
  %396 = vmatpush1.xpose.msra.mxu0 0.0
  %397 = vmatprep.subr.mxu0 0.0
  %398 = vmatpush1.xpose.msra.mxu0 0.0
  %399 = vmatprep.subr.mxu0 0.0
  %400 = vmatpush1.xpose.msra.mxu0 0.0
  %401 = vmatprep.subr.mxu0 0.0
  %402 = vmatpush1.xpose.msra.mxu0 0.0
  %403 = vmatprep.subr.mxu0 0.0
  %404 = vmatpush1.xpose.msra.mxu0 0.0
  %405 = vmatprep.subr.mxu0 0.0
  %406 = vmatpush1.xpose.msra.mxu0 0.0
  %407 = vmatprep.subr.mxu0 0.0
  %408 = vmatpush1.xpose.msra.mxu0 0.0
  %409 = vmatprep.subr.mxu0 0.0
  %410 = vmatpush1.xpose.msra.mxu0 0.0
  %411 = vmatprep.subr.mxu0 0.0
  %412 = vmatpush1.xpose.msra.mxu0 0.0
  %413 = vmatprep.subr.mxu0 0.0
  %414 = vmatpush1.xpose.msra.mxu0 0.0
  %415 = vmatprep.subr.mxu0 0.0
  %416 = vmatpush1.xpose.msra.mxu0 0.0
  %417 = vmatprep.subr.mxu0 0.0
  %418 = vmatpush1.xpose.msra.mxu0 0.0
  %419 = vmatprep.subr.mxu0 0.0
  %420 = vmatpush1.xpose.msra.mxu0 0.0
  %421 = vmatprep.subr.mxu0 0.0
  %422 = vmatpush1.xpose.msra.mxu0 0.0
  %423 = vmatprep.subr.mxu0 0.0
  %424 = vmatpush1.xpose.msra.mxu0 0.0
  %425 = vmatprep.mubr.f32.mxu0 0.0
  %426 = vmatmul.mubr.f32.gmra.mrb[0].mxu0 %v357
  %v427 = vpop.f32.mrb[0].mxu0
  %v428 = vadd.f32 %v201, %v427
  %v429 = vpop.f32.mrb[0].mxu0
  %430 = vdwg.mxu0
  %431 = vrot.lane.b32.xlu0 %v192, 96
  %v432 = vpop.permute.xlu0 %431
  %v433 = vsel %vm204, %v192, 0
  %v435 = vsel %vm204, %v432, 0
  %437 = vmatprep.subr.mxu0 0.0
  %438 = vmatpush1.xpose.msra.mxu0 %v435
  %439 = vmatprep.subr.mxu0 0.0
  %440 = vmatpush1.xpose.msra.mxu0 0.0
  %441 = vmatprep.subr.mxu0 0.0
  %442 = vmatpush1.xpose.msra.mxu0 0.0
  %443 = vmatprep.subr.mxu0 0.0
  %444 = vmatpush1.xpose.msra.mxu0 0.0
  %445 = vmatprep.subr.mxu0 0.0
  %446 = vmatpush1.xpose.msra.mxu0 0.0
  %447 = vmatprep.subr.mxu0 0.0
  %448 = vmatpush1.xpose.msra.mxu0 0.0
  %449 = vmatprep.subr.mxu0 0.0
  %450 = vmatpush1.xpose.msra.mxu0 0.0
  %451 = vmatprep.subr.mxu0 0.0
  %452 = vmatpush1.xpose.msra.mxu0 0.0
  %453 = vmatprep.subr.mxu0 0.0
  %454 = vmatpush1.xpose.msra.mxu0 0.0
  %455 = vmatprep.subr.mxu0 0.0
  %456 = vmatpush1.xpose.msra.mxu0 0.0
  %457 = vmatprep.subr.mxu0 0.0
  %458 = vmatpush1.xpose.msra.mxu0 0.0
  %459 = vmatprep.subr.mxu0 0.0
  %460 = vmatpush1.xpose.msra.mxu0 0.0
  %461 = vmatprep.subr.mxu0 0.0
  %462 = vmatpush1.xpose.msra.mxu0 0.0
  %463 = vmatprep.subr.mxu0 0.0
  %464 = vmatpush1.xpose.msra.mxu0 0.0
  %465 = vmatprep.subr.mxu0 0.0
  %466 = vmatpush1.xpose.msra.mxu0 0.0
  %467 = vmatprep.subr.mxu0 0.0
  %468 = vmatpush1.xpose.msra.mxu0 0.0
  %469 = vmatprep.subr.mxu0 0.0
  %470 = vmatpush1.xpose.msra.mxu0 0.0
  %471 = vmatprep.subr.mxu0 0.0
  %472 = vmatpush1.xpose.msra.mxu0 0.0
  %473 = vmatprep.subr.mxu0 0.0
  %474 = vmatpush1.xpose.msra.mxu0 0.0
  %475 = vmatprep.subr.mxu0 0.0
  %476 = vmatpush1.xpose.msra.mxu0 0.0
  %477 = vmatprep.subr.mxu0 0.0
  %478 = vmatpush1.xpose.msra.mxu0 0.0
  %479 = vmatprep.subr.mxu0 0.0
  %480 = vmatpush1.xpose.msra.mxu0 0.0
  %481 = vmatprep.subr.mxu0 0.0
  %482 = vmatpush1.xpose.msra.mxu0 0.0
  %483 = vmatprep.subr.mxu0 0.0
  %484 = vmatpush1.xpose.msra.mxu0 0.0
  %485 = vmatprep.subr.mxu0 0.0
  %486 = vmatpush1.xpose.msra.mxu0 0.0
  %487 = vmatprep.subr.mxu0 0.0
  %488 = vmatpush1.xpose.msra.mxu0 0.0
  %489 = vmatprep.subr.mxu0 0.0
  %490 = vmatpush1.xpose.msra.mxu0 0.0
  %491 = vmatprep.subr.mxu0 0.0
  %492 = vmatpush1.xpose.msra.mxu0 0.0
  %493 = vmatprep.subr.mxu0 0.0
  %494 = vmatpush1.xpose.msra.mxu0 0.0
  %495 = vmatprep.subr.mxu0 0.0
  %496 = vmatpush1.xpose.msra.mxu0 0.0
  %497 = vmatprep.subr.mxu0 0.0
  %498 = vmatpush1.xpose.msra.mxu0 0.0
  %499 = vmatprep.subr.mxu0 0.0
  %500 = vmatpush1.xpose.msra.mxu0 0.0
  %501 = vmatprep.mubr.f32.mxu0 0.0
  %502 = vmatmul.mubr.f32.gmra.mrb[0].mxu0 %v433
  %v503 = vpop.f32.mrb[0].mxu0
  %v504 = vadd.f32 %v201, %v503
  %v505 = vpop.f32.mrb[0].mxu0
  %506 = vdwg.mxu0
  %507 = vrot.lane.b32.xlu0 %v194, 96
  %v508 = vpop.permute.xlu0 %507
  %v509 = vsel %vm204, %v194, 0
  %v511 = vsel %vm204, %v508, 0
  %513 = vmatprep.subr.mxu0 0.0
  %514 = vmatpush1.xpose.msra.mxu0 %v511
  %515 = vmatprep.subr.mxu0 0.0
  %516 = vmatpush1.xpose.msra.mxu0 0.0
  %517 = vmatprep.subr.mxu0 0.0
  %518 = vmatpush1.xpose.msra.mxu0 0.0
  %519 = vmatprep.subr.mxu0 0.0
  %520 = vmatpush1.xpose.msra.mxu0 0.0
  %521 = vmatprep.subr.mxu0 0.0
  %522 = vmatpush1.xpose.msra.mxu0 0.0
  %523 = vmatprep.subr.mxu0 0.0
  %524 = vmatpush1.xpose.msra.mxu0 0.0
  %525 = vmatprep.subr.mxu0 0.0
  %526 = vmatpush1.xpose.msra.mxu0 0.0
  %527 = vmatprep.subr.mxu0 0.0
  %528 = vmatpush1.xpose.msra.mxu0 0.0
  %529 = vmatprep.subr.mxu0 0.0
  %530 = vmatpush1.xpose.msra.mxu0 0.0
  %531 = vmatprep.subr.mxu0 0.0
  %532 = vmatpush1.xpose.msra.mxu0 0.0
  %533 = vmatprep.subr.mxu0 0.0
  %534 = vmatpush1.xpose.msra.mxu0 0.0
  %535 = vmatprep.subr.mxu0 0.0
  %536 = vmatpush1.xpose.msra.mxu0 0.0
  %537 = vmatprep.subr.mxu0 0.0
  %538 = vmatpush1.xpose.msra.mxu0 0.0
  %539 = vmatprep.subr.mxu0 0.0
  %540 = vmatpush1.xpose.msra.mxu0 0.0
  %541 = vmatprep.subr.mxu0 0.0
  %542 = vmatpush1.xpose.msra.mxu0 0.0
  %543 = vmatprep.subr.mxu0 0.0
  %544 = vmatpush1.xpose.msra.mxu0 0.0
  %545 = vmatprep.subr.mxu0 0.0
  %546 = vmatpush1.xpose.msra.mxu0 0.0
  %547 = vmatprep.subr.mxu0 0.0
  %548 = vmatpush1.xpose.msra.mxu0 0.0
  %549 = vmatprep.subr.mxu0 0.0
  %550 = vmatpush1.xpose.msra.mxu0 0.0
  %551 = vmatprep.subr.mxu0 0.0
  %552 = vmatpush1.xpose.msra.mxu0 0.0
  %553 = vmatprep.subr.mxu0 0.0
  %554 = vmatpush1.xpose.msra.mxu0 0.0
  %555 = vmatprep.subr.mxu0 0.0
  %556 = vmatpush1.xpose.msra.mxu0 0.0
  %557 = vmatprep.subr.mxu0 0.0
  %558 = vmatpush1.xpose.msra.mxu0 0.0
  %559 = vmatprep.subr.mxu0 0.0
  %560 = vmatpush1.xpose.msra.mxu0 0.0
  %561 = vmatprep.subr.mxu0 0.0
  %562 = vmatpush1.xpose.msra.mxu0 0.0
  %563 = vmatprep.subr.mxu0 0.0
  %564 = vmatpush1.xpose.msra.mxu0 0.0
  %565 = vmatprep.subr.mxu0 0.0
  %566 = vmatpush1.xpose.msra.mxu0 0.0
  %567 = vmatprep.subr.mxu0 0.0
  %568 = vmatpush1.xpose.msra.mxu0 0.0
  %569 = vmatprep.subr.mxu0 0.0
  %570 = vmatpush1.xpose.msra.mxu0 0.0
  %571 = vmatprep.subr.mxu0 0.0
  %572 = vmatpush1.xpose.msra.mxu0 0.0
  %573 = vmatprep.subr.mxu0 0.0
  %574 = vmatpush1.xpose.msra.mxu0 0.0
  %575 = vmatprep.subr.mxu0 0.0
  %576 = vmatpush1.xpose.msra.mxu0 0.0
  %577 = vmatprep.mubr.f32.mxu0 0.0
  %578 = vmatmul.mubr.f32.gmra.mrb[0].mxu0 %v509
  %v579 = vpop.f32.mrb[0].mxu0
  %v580 = vadd.f32 %v201, %v579
  %v581 = vpop.f32.mrb[0].mxu0
  %582 = vdwg.mxu0
  %583 = vrot.lane.b32.xlu0 %v196, 96
  %v584 = vpop.permute.xlu0 %583
  %v585 = vsel %vm204, %v196, 0
  %v587 = vsel %vm204, %v584, 0
  %589 = vmatprep.subr.mxu0 0.0
  %590 = vmatpush1.xpose.msra.mxu0 %v587
  %591 = vmatprep.subr.mxu0 0.0
  %592 = vmatpush1.xpose.msra.mxu0 0.0
  %593 = vmatprep.subr.mxu0 0.0
  %594 = vmatpush1.xpose.msra.mxu0 0.0
  %595 = vmatprep.subr.mxu0 0.0
  %596 = vmatpush1.xpose.msra.mxu0 0.0
  %597 = vmatprep.subr.mxu0 0.0
  %598 = vmatpush1.xpose.msra.mxu0 0.0
  %599 = vmatprep.subr.mxu0 0.0
  %600 = vmatpush1.xpose.msra.mxu0 0.0
  %601 = vmatprep.subr.mxu0 0.0
  %602 = vmatpush1.xpose.msra.mxu0 0.0
  %603 = vmatprep.subr.mxu0 0.0
  %604 = vmatpush1.xpose.msra.mxu0 0.0
  %605 = vmatprep.subr.mxu0 0.0
  %606 = vmatpush1.xpose.msra.mxu0 0.0
  %607 = vmatprep.subr.mxu0 0.0
  %608 = vmatpush1.xpose.msra.mxu0 0.0
  %609 = vmatprep.subr.mxu0 0.0
  %610 = vmatpush1.xpose.msra.mxu0 0.0
  %611 = vmatprep.subr.mxu0 0.0
  %612 = vmatpush1.xpose.msra.mxu0 0.0
  %613 = vmatprep.subr.mxu0 0.0
  %614 = vmatpush1.xpose.msra.mxu0 0.0
  %615 = vmatprep.subr.mxu0 0.0
  %616 = vmatpush1.xpose.msra.mxu0 0.0
  %617 = vmatprep.subr.mxu0 0.0
  %618 = vmatpush1.xpose.msra.mxu0 0.0
  %619 = vmatprep.subr.mxu0 0.0
  %620 = vmatpush1.xpose.msra.mxu0 0.0
  %621 = vmatprep.subr.mxu0 0.0
  %622 = vmatpush1.xpose.msra.mxu0 0.0
  %623 = vmatprep.subr.mxu0 0.0
  %624 = vmatpush1.xpose.msra.mxu0 0.0
  %625 = vmatprep.subr.mxu0 0.0
  %626 = vmatpush1.xpose.msra.mxu0 0.0
  %627 = vmatprep.subr.mxu0 0.0
  %628 = vmatpush1.xpose.msra.mxu0 0.0
  %629 = vmatprep.subr.mxu0 0.0
  %630 = vmatpush1.xpose.msra.mxu0 0.0
  %631 = vmatprep.subr.mxu0 0.0
  %632 = vmatpush1.xpose.msra.mxu0 0.0
  %633 = vmatprep.subr.mxu0 0.0
  %634 = vmatpush1.xpose.msra.mxu0 0.0
  %635 = vmatprep.subr.mxu0 0.0
  %636 = vmatpush1.xpose.msra.mxu0 0.0
  %637 = vmatprep.subr.mxu0 0.0
  %638 = vmatpush1.xpose.msra.mxu0 0.0
  %639 = vmatprep.subr.mxu0 0.0
  %640 = vmatpush1.xpose.msra.mxu0 0.0
  %641 = vmatprep.subr.mxu0 0.0
  %642 = vmatpush1.xpose.msra.mxu0 0.0
  %643 = vmatprep.subr.mxu0 0.0
  %644 = vmatpush1.xpose.msra.mxu0 0.0
  %645 = vmatprep.subr.mxu0 0.0
  %646 = vmatpush1.xpose.msra.mxu0 0.0
  %647 = vmatprep.subr.mxu0 0.0
  %648 = vmatpush1.xpose.msra.mxu0 0.0
  %649 = vmatprep.subr.mxu0 0.0
  %650 = vmatpush1.xpose.msra.mxu0 0.0
  %651 = vmatprep.subr.mxu0 0.0
  %652 = vmatpush1.xpose.msra.mxu0 0.0
  %653 = vmatprep.mubr.f32.mxu0 0.0
  %654 = vmatmul.mubr.f32.gmra.mrb[0].mxu0 %v585
  %v655 = vpop.f32.mrb[0].mxu0
  %v656 = vadd.f32 %v201, %v655
  %v657 = vpop.f32.mrb[0].mxu0
  %658 = vdwg.mxu0
  %659 = vrot.lane.b32.xlu0 %v198, 96
  %v660 = vpop.permute.xlu0 %659
  %v661 = vsel %vm204, %v198, 0
  %v663 = vsel %vm204, %v660, 0
  %665 = vmatprep.subr.mxu0 0.0
  %666 = vmatpush1.xpose.msra.mxu0 %v663
  %667 = vmatprep.subr.mxu0 0.0
  %668 = vmatpush1.xpose.msra.mxu0 0.0
  %669 = vmatprep.subr.mxu0 0.0
  %670 = vmatpush1.xpose.msra.mxu0 0.0
  %671 = vmatprep.subr.mxu0 0.0
  %672 = vmatpush1.xpose.msra.mxu0 0.0
  %673 = vmatprep.subr.mxu0 0.0
  %674 = vmatpush1.xpose.msra.mxu0 0.0
  %675 = vmatprep.subr.mxu0 0.0
  %676 = vmatpush1.xpose.msra.mxu0 0.0
  %677 = vmatprep.subr.mxu0 0.0
  %678 = vmatpush1.xpose.msra.mxu0 0.0
  %679 = vmatprep.subr.mxu0 0.0
  %680 = vmatpush1.xpose.msra.mxu0 0.0
  %681 = vmatprep.subr.mxu0 0.0
  %682 = vmatpush1.xpose.msra.mxu0 0.0
  %683 = vmatprep.subr.mxu0 0.0
  %684 = vmatpush1.xpose.msra.mxu0 0.0
  %685 = vmatprep.subr.mxu0 0.0
  %686 = vmatpush1.xpose.msra.mxu0 0.0
  %687 = vmatprep.subr.mxu0 0.0
  %688 = vmatpush1.xpose.msra.mxu0 0.0
  %689 = vmatprep.subr.mxu0 0.0
  %690 = vmatpush1.xpose.msra.mxu0 0.0
  %691 = vmatprep.subr.mxu0 0.0
  %692 = vmatpush1.xpose.msra.mxu0 0.0
  %693 = vmatprep.subr.mxu0 0.0
  %694 = vmatpush1.xpose.msra.mxu0 0.0
  %695 = vmatprep.subr.mxu0 0.0
  %696 = vmatpush1.xpose.msra.mxu0 0.0
  %697 = vmatprep.subr.mxu0 0.0
  %698 = vmatpush1.xpose.msra.mxu0 0.0
  %699 = vmatprep.subr.mxu0 0.0
  %700 = vmatpush1.xpose.msra.mxu0 0.0
  %701 = vmatprep.subr.mxu0 0.0
  %702 = vmatpush1.xpose.msra.mxu0 0.0
  %703 = vmatprep.subr.mxu0 0.0
  %704 = vmatpush1.xpose.msra.mxu0 0.0
  %705 = vmatprep.subr.mxu0 0.0
  %706 = vmatpush1.xpose.msra.mxu0 0.0
  %707 = vmatprep.subr.mxu0 0.0
  %708 = vmatpush1.xpose.msra.mxu0 0.0
  %709 = vmatprep.subr.mxu0 0.0
  %710 = vmatpush1.xpose.msra.mxu0 0.0
  %711 = vmatprep.subr.mxu0 0.0
  %712 = vmatpush1.xpose.msra.mxu0 0.0
  %713 = vmatprep.subr.mxu0 0.0
  %714 = vmatpush1.xpose.msra.mxu0 0.0
  %715 = vmatprep.subr.mxu0 0.0
  %716 = vmatpush1.xpose.msra.mxu0 0.0
  %717 = vmatprep.subr.mxu0 0.0
  %718 = vmatpush1.xpose.msra.mxu0 0.0
  %719 = vmatprep.subr.mxu0 0.0
  %720 = vmatpush1.xpose.msra.mxu0 0.0
  %721 = vmatprep.subr.mxu0 0.0
  %722 = vmatpush1.xpose.msra.mxu0 0.0
  %723 = vmatprep.subr.mxu0 0.0
  %724 = vmatpush1.xpose.msra.mxu0 0.0
  %725 = vmatprep.subr.mxu0 0.0
  %726 = vmatpush1.xpose.msra.mxu0 0.0
  %727 = vmatprep.subr.mxu0 0.0
  %728 = vmatpush1.xpose.msra.mxu0 0.0
  %729 = vmatprep.mubr.f32.mxu0 0.0
  %730 = vmatmul.mubr.f32.gmra.mrb[0].mxu0 %v661
  %v731 = vpop.f32.mrb[0].mxu0
  %v732 = vadd.f32 %v201, %v731
  %v733 = vpop.f32.mrb[0].mxu0
  %734 = vdwg.mxu0
  %735 = vrot.lane.b32.xlu0 %v200, 96
  %v736 = vpop.permute.xlu0 %735
  %v737 = vsel %vm204, %v200, 0
  %v739 = vsel %vm204, %v736, 0
  %741 = vmatprep.subr.mxu0 0.0
  %742 = vmatpush1.xpose.msra.mxu0 %v739
  %743 = vmatprep.subr.mxu0 0.0
  %744 = vmatpush1.xpose.msra.mxu0 0.0
  %745 = vmatprep.subr.mxu0 0.0
  %746 = vmatpush1.xpose.msra.mxu0 0.0
  %747 = vmatprep.subr.mxu0 0.0
  %748 = vmatpush1.xpose.msra.mxu0 0.0
  %749 = vmatprep.subr.mxu0 0.0
  %750 = vmatpush1.xpose.msra.mxu0 0.0
  %751 = vmatprep.subr.mxu0 0.0
  %752 = vmatpush1.xpose.msra.mxu0 0.0
  %753 = vmatprep.subr.mxu0 0.0
  %754 = vmatpush1.xpose.msra.mxu0 0.0
  %755 = vmatprep.subr.mxu0 0.0
  %756 = vmatpush1.xpose.msra.mxu0 0.0
  %757 = vmatprep.subr.mxu0 0.0
  %758 = vmatpush1.xpose.msra.mxu0 0.0
  %759 = vmatprep.subr.mxu0 0.0
  %760 = vmatpush1.xpose.msra.mxu0 0.0
  %761 = vmatprep.subr.mxu0 0.0
  %762 = vmatpush1.xpose.msra.mxu0 0.0
  %763 = vmatprep.subr.mxu0 0.0
  %764 = vmatpush1.xpose.msra.mxu0 0.0
  %765 = vmatprep.subr.mxu0 0.0
  %766 = vmatpush1.xpose.msra.mxu0 0.0
  %767 = vmatprep.subr.mxu0 0.0
  %768 = vmatpush1.xpose.msra.mxu0 0.0
  %769 = vmatprep.subr.mxu0 0.0
  %770 = vmatpush1.xpose.msra.mxu0 0.0
  %771 = vmatprep.subr.mxu0 0.0
  %772 = vmatpush1.xpose.msra.mxu0 0.0
  %773 = vmatprep.subr.mxu0 0.0
  %774 = vmatpush1.xpose.msra.mxu0 0.0
  %775 = vmatprep.subr.mxu0 0.0
  %776 = vmatpush1.xpose.msra.mxu0 0.0
  %777 = vmatprep.subr.mxu0 0.0
  %778 = vmatpush1.xpose.msra.mxu0 0.0
  %779 = vmatprep.subr.mxu0 0.0
  %780 = vmatpush1.xpose.msra.mxu0 0.0
  %781 = vmatprep.subr.mxu0 0.0
  %782 = vmatpush1.xpose.msra.mxu0 0.0
  %783 = vmatprep.subr.mxu0 0.0
  %784 = vmatpush1.xpose.msra.mxu0 0.0
  %785 = vmatprep.subr.mxu0 0.0
  %786 = vmatpush1.xpose.msra.mxu0 0.0
  %787 = vmatprep.subr.mxu0 0.0
  %788 = vmatpush1.xpose.msra.mxu0 0.0
  %789 = vmatprep.subr.mxu0 0.0
  %790 = vmatpush1.xpose.msra.mxu0 0.0
  %791 = vmatprep.subr.mxu0 0.0
  %792 = vmatpush1.xpose.msra.mxu0 0.0
  %793 = vmatprep.subr.mxu0 0.0
  %794 = vmatpush1.xpose.msra.mxu0 0.0
  %795 = vmatprep.subr.mxu0 0.0
  %796 = vmatpush1.xpose.msra.mxu0 0.0
  %797 = vmatprep.subr.mxu0 0.0
  %798 = vmatpush1.xpose.msra.mxu0 0.0
  %799 = vmatprep.subr.mxu0 0.0
  %800 = vmatpush1.xpose.msra.mxu0 0.0
  %801 = vmatprep.subr.mxu0 0.0
  %802 = vmatpush1.xpose.msra.mxu0 0.0
  %803 = vmatprep.subr.mxu0 0.0
  %804 = vmatpush1.xpose.msra.mxu0 0.0
  %805 = vmatprep.mubr.f32.mxu0 0.0
  %806 = vmatmul.mubr.f32.gmra.mrb[0].mxu0 %v737
  %v807 = vpop.f32.mrb[0].mxu0
  %v808 = vadd.f32 %v201, %v807
  %v809 = vpop.f32.mrb[0].mxu0
  %810 = vdwg.mxu0
  %v811 = vsel %vm204, %v276, -inf
  %812 = vmax.xlane.f32.xlu0 %v811
  %v813 = vpop.xlane.xlu0 %812
  %v814 = vsel %vm204, %v352, -inf
  %815 = vmax.xlane.f32.xlu0 %v814
  %v816 = vpop.xlane.xlu0 %815
  %v817 = vsel %vm204, %v428, -inf
  %818 = vmax.xlane.f32.xlu0 %v817
  %v819 = vpop.xlane.xlu0 %818
  %v820 = vsel %vm204, %v504, -inf
  %821 = vmax.xlane.f32.xlu0 %v820
  %v822 = vpop.xlane.xlu0 %821
  %v823 = vsel %vm204, %v580, -inf
  %824 = vmax.xlane.f32.xlu0 %v823
  %v825 = vpop.xlane.xlu0 %824
  %v826 = vsel %vm204, %v656, -inf
  %827 = vmax.xlane.f32.xlu0 %v826
  %v828 = vpop.xlane.xlu0 %827
  %v829 = vsel %vm204, %v732, -inf
  %830 = vmax.xlane.f32.xlu0 %v829
  %v831 = vpop.xlane.xlu0 %830
  %v832 = vsel %vm204, %v808, -inf
  %833 = vmax.xlane.f32.xlu0 %v832
  %v834 = vpop.xlane.xlu0 %833
  %v835 = vsub.f32 %v276, %v813
  %v836 = vsub.f32 %v352, %v816
  %v837 = vsub.f32 %v428, %v819
  %v838 = vsub.f32 %v504, %v822
  %v839 = vsub.f32 %v580, %v825
  %v840 = vsub.f32 %v656, %v828
  %v841 = vsub.f32 %v732, %v831
  %v842 = vsub.f32 %v808, %v834
  %v843 = vmul.f32 %v835, 1.442695
  %v844 = vpow.pop %v843
  %v845 = vmul.f32 %v836, 1.442695
  %v846 = vpow.pop %v845
  %v847 = vmul.f32 %v837, 1.442695
  %v848 = vpow.pop %v847
  %v849 = vmul.f32 %v838, 1.442695
  %v850 = vpow.pop %v849
  %v851 = vmul.f32 %v839, 1.442695
  %v852 = vpow.pop %v851
  %v853 = vmul.f32 %v840, 1.442695
  %v854 = vpow.pop %v853
  %v855 = vmul.f32 %v841, 1.442695
  %v856 = vpow.pop %v855
  %v857 = vmul.f32 %v842, 1.442695
  %v858 = vpow.pop %v857
  %v859 = vsel %vm204, %v844, 0.0
  %860 = vadd.xlane.f32.xlu0 %v859
  %v861 = vpop.xlane.xlu0 %860
  %v862 = vsel %vm204, %v846, 0.0
  %863 = vadd.xlane.f32.xlu0 %v862
  %v864 = vpop.xlane.xlu0 %863
  %v865 = vsel %vm204, %v848, 0.0
  %866 = vadd.xlane.f32.xlu0 %v865
  %v867 = vpop.xlane.xlu0 %866
  %v868 = vsel %vm204, %v850, 0.0
  %869 = vadd.xlane.f32.xlu0 %v868
  %v870 = vpop.xlane.xlu0 %869
  %v871 = vsel %vm204, %v852, 0.0
  %872 = vadd.xlane.f32.xlu0 %v871
  %v873 = vpop.xlane.xlu0 %872
  %v874 = vsel %vm204, %v854, 0.0
  %875 = vadd.xlane.f32.xlu0 %v874
  %v876 = vpop.xlane.xlu0 %875
  %v877 = vsel %vm204, %v856, 0.0
  %878 = vadd.xlane.f32.xlu0 %v877
  %v879 = vpop.xlane.xlu0 %878
  %v880 = vsel %vm204, %v858, 0.0
  %881 = vadd.xlane.f32.xlu0 %v880
  %v882 = vpop.xlane.xlu0 %881
  %v883 = vrcp.pop %v861
  %v884 = vmul.f32 %v844, %v883
  %v885 = vrcp.pop %v864
  %v886 = vmul.f32 %v846, %v885
  %v887 = vrcp.pop %v867
  %v888 = vmul.f32 %v848, %v887
  %v889 = vrcp.pop %v870
  %v890 = vmul.f32 %v850, %v889
  %v891 = vrcp.pop %v873
  %v892 = vmul.f32 %v852, %v891
  %v893 = vrcp.pop %v876
  %v894 = vmul.f32 %v854, %v893
  %v895 = vrcp.pop %v879
  %v896 = vmul.f32 %v856, %v895
  %v897 = vrcp.pop %v882
  %v898 = vmul.f32 %v858, %v897
  %899 = vrot.lane.b32.xlu0 %v179, 64
  %v900 = vpop.permute.xlu0 %899
  %v903 = vsel %vm204, %v884, 0
  %905 = vmatprep.subr.mxu0 0.0
  %906 = vmatpush1.msra.mxu0 %v900
  %907 = vmatprep.subr.mxu0 0.0
  %908 = vmatpush1.msra.mxu0 0.0
  %909 = vmatprep.subr.mxu0 0.0
  %910 = vmatpush1.msra.mxu0 0.0
  %911 = vmatprep.subr.mxu0 0.0
  %912 = vmatpush1.msra.mxu0 0.0
  %913 = vmatprep.subr.mxu0 0.0
  %914 = vmatpush1.msra.mxu0 0.0
  %915 = vmatprep.subr.mxu0 0.0
  %916 = vmatpush1.msra.mxu0 0.0
  %917 = vmatprep.subr.mxu0 0.0
  %918 = vmatpush1.msra.mxu0 0.0
  %919 = vmatprep.subr.mxu0 0.0
  %920 = vmatpush1.msra.mxu0 0.0
  %921 = vmatprep.subr.mxu0 0.0
  %922 = vmatpush1.msra.mxu0 0.0
  %923 = vmatprep.subr.mxu0 0.0
  %924 = vmatpush1.msra.mxu0 0.0
  %925 = vmatprep.subr.mxu0 0.0
  %926 = vmatpush1.msra.mxu0 0.0
  %927 = vmatprep.subr.mxu0 0.0
  %928 = vmatpush1.msra.mxu0 0.0
  %929 = vmatprep.subr.mxu0 0.0
  %930 = vmatpush1.msra.mxu0 0.0
  %931 = vmatprep.subr.mxu0 0.0
  %932 = vmatpush1.msra.mxu0 0.0
  %933 = vmatprep.subr.mxu0 0.0
  %934 = vmatpush1.msra.mxu0 0.0
  %935 = vmatprep.subr.mxu0 0.0
  %936 = vmatpush1.msra.mxu0 0.0
  %937 = vmatprep.subr.mxu0 0.0
  %938 = vmatpush1.msra.mxu0 0.0
  %939 = vmatprep.subr.mxu0 0.0
  %940 = vmatpush1.msra.mxu0 0.0
  %941 = vmatprep.subr.mxu0 0.0
  %942 = vmatpush1.msra.mxu0 0.0
  %943 = vmatprep.subr.mxu0 0.0
  %944 = vmatpush1.msra.mxu0 0.0
  %945 = vmatprep.subr.mxu0 0.0
  %946 = vmatpush1.msra.mxu0 0.0
  %947 = vmatprep.subr.mxu0 0.0
  %948 = vmatpush1.msra.mxu0 0.0
  %949 = vmatprep.subr.mxu0 0.0
  %950 = vmatpush1.msra.mxu0 0.0
  %951 = vmatprep.subr.mxu0 0.0
  %952 = vmatpush1.msra.mxu0 0.0
  %953 = vmatprep.subr.mxu0 0.0
  %954 = vmatpush1.msra.mxu0 0.0
  %955 = vmatprep.subr.mxu0 0.0
  %956 = vmatpush1.msra.mxu0 0.0
  %957 = vmatprep.subr.mxu0 0.0
  %958 = vmatpush1.msra.mxu0 0.0
  %959 = vmatprep.subr.mxu0 0.0
  %960 = vmatpush1.msra.mxu0 0.0
  %961 = vmatprep.subr.mxu0 0.0
  %962 = vmatpush1.msra.mxu0 0.0
  %963 = vmatprep.subr.mxu0 0.0
  %964 = vmatpush1.msra.mxu0 0.0
  %965 = vmatprep.subr.mxu0 0.0
  %966 = vmatpush1.msra.mxu0 0.0
  %967 = vmatprep.subr.mxu0 0.0
  %968 = vmatpush1.msra.mxu0 0.0
  %969 = vmatprep.mubr.f32.mxu0 0.0
  %970 = vmatmul.mubr.f32.gmra.mrb[0].mxu0 %v903
  %v971 = vpop.f32.mrb[0].mxu0
  %v972 = vadd.f32 0.0, %v971
  %v973 = vpop.f32.mrb[0].mxu0
  %974 = vdwg.mxu0
  %975 = vrot.lane.b32.xlu0 %v184, 64
  %v976 = vpop.permute.xlu0 %975
  %v979 = vsel %vm204, %v886, 0
  %981 = vmatprep.subr.mxu0 0.0
  %982 = vmatpush1.msra.mxu0 %v976
  %983 = vmatprep.subr.mxu0 0.0
  %984 = vmatpush1.msra.mxu0 0.0
  %985 = vmatprep.subr.mxu0 0.0
  %986 = vmatpush1.msra.mxu0 0.0
  %987 = vmatprep.subr.mxu0 0.0
  %988 = vmatpush1.msra.mxu0 0.0
  %989 = vmatprep.subr.mxu0 0.0
  %990 = vmatpush1.msra.mxu0 0.0
  %991 = vmatprep.subr.mxu0 0.0
  %992 = vmatpush1.msra.mxu0 0.0
  %993 = vmatprep.subr.mxu0 0.0
  %994 = vmatpush1.msra.mxu0 0.0
  %995 = vmatprep.subr.mxu0 0.0
  %996 = vmatpush1.msra.mxu0 0.0
  %997 = vmatprep.subr.mxu0 0.0
  %998 = vmatpush1.msra.mxu0 0.0
  %999 = vmatprep.subr.mxu0 0.0
  %1000 = vmatpush1.msra.mxu0 0.0
  %1001 = vmatprep.subr.mxu0 0.0
  %1002 = vmatpush1.msra.mxu0 0.0
  %1003 = vmatprep.subr.mxu0 0.0
  %1004 = vmatpush1.msra.mxu0 0.0
  %1005 = vmatprep.subr.mxu0 0.0
  %1006 = vmatpush1.msra.mxu0 0.0
  %1007 = vmatprep.subr.mxu0 0.0
  %1008 = vmatpush1.msra.mxu0 0.0
  %1009 = vmatprep.subr.mxu0 0.0
  %1010 = vmatpush1.msra.mxu0 0.0
  %1011 = vmatprep.subr.mxu0 0.0
  %1012 = vmatpush1.msra.mxu0 0.0
  %1013 = vmatprep.subr.mxu0 0.0
  %1014 = vmatpush1.msra.mxu0 0.0
  %1015 = vmatprep.subr.mxu0 0.0
  %1016 = vmatpush1.msra.mxu0 0.0
  %1017 = vmatprep.subr.mxu0 0.0
  %1018 = vmatpush1.msra.mxu0 0.0
  %1019 = vmatprep.subr.mxu0 0.0
  %1020 = vmatpush1.msra.mxu0 0.0
  %1021 = vmatprep.subr.mxu0 0.0
  %1022 = vmatpush1.msra.mxu0 0.0
  %1023 = vmatprep.subr.mxu0 0.0
  %1024 = vmatpush1.msra.mxu0 0.0
  %1025 = vmatprep.subr.mxu0 0.0
  %1026 = vmatpush1.msra.mxu0 0.0
  %1027 = vmatprep.subr.mxu0 0.0
  %1028 = vmatpush1.msra.mxu0 0.0
  %1029 = vmatprep.subr.mxu0 0.0
  %1030 = vmatpush1.msra.mxu0 0.0
  %1031 = vmatprep.subr.mxu0 0.0
  %1032 = vmatpush1.msra.mxu0 0.0
  %1033 = vmatprep.subr.mxu0 0.0
  %1034 = vmatpush1.msra.mxu0 0.0
  %1035 = vmatprep.subr.mxu0 0.0
  %1036 = vmatpush1.msra.mxu0 0.0
  %1037 = vmatprep.subr.mxu0 0.0
  %1038 = vmatpush1.msra.mxu0 0.0
  %1039 = vmatprep.subr.mxu0 0.0
  %1040 = vmatpush1.msra.mxu0 0.0
  %1041 = vmatprep.subr.mxu0 0.0
  %1042 = vmatpush1.msra.mxu0 0.0
  %1043 = vmatprep.subr.mxu0 0.0
  %1044 = vmatpush1.msra.mxu0 0.0
  %1045 = vmatprep.mubr.f32.mxu0 0.0
  %1046 = vmatmul.mubr.f32.gmra.mrb[0].mxu0 %v979
  %v1047 = vpop.f32.mrb[0].mxu0
  %v1048 = vadd.f32 0.0, %v1047
  %v1049 = vpop.f32.mrb[0].mxu0
  %1050 = vdwg.mxu0
  %1051 = vrot.lane.b32.xlu0 %v190, 64
  %v1052 = vpop.permute.xlu0 %1051
  %v1055 = vsel %vm204, %v888, 0
  %1057 = vmatprep.subr.mxu0 0.0
  %1058 = vmatpush1.msra.mxu0 %v1052
  %1059 = vmatprep.subr.mxu0 0.0
  %1060 = vmatpush1.msra.mxu0 0.0
  %1061 = vmatprep.subr.mxu0 0.0
  %1062 = vmatpush1.msra.mxu0 0.0
  %1063 = vmatprep.subr.mxu0 0.0
  %1064 = vmatpush1.msra.mxu0 0.0
  %1065 = vmatprep.subr.mxu0 0.0
  %1066 = vmatpush1.msra.mxu0 0.0
  %1067 = vmatprep.subr.mxu0 0.0
  %1068 = vmatpush1.msra.mxu0 0.0
  %1069 = vmatprep.subr.mxu0 0.0
  %1070 = vmatpush1.msra.mxu0 0.0
  %1071 = vmatprep.subr.mxu0 0.0
  %1072 = vmatpush1.msra.mxu0 0.0
  %1073 = vmatprep.subr.mxu0 0.0
  %1074 = vmatpush1.msra.mxu0 0.0
  %1075 = vmatprep.subr.mxu0 0.0
  %1076 = vmatpush1.msra.mxu0 0.0
  %1077 = vmatprep.subr.mxu0 0.0
  %1078 = vmatpush1.msra.mxu0 0.0
  %1079 = vmatprep.subr.mxu0 0.0
  %1080 = vmatpush1.msra.mxu0 0.0
  %1081 = vmatprep.subr.mxu0 0.0
  %1082 = vmatpush1.msra.mxu0 0.0
  %1083 = vmatprep.subr.mxu0 0.0
  %1084 = vmatpush1.msra.mxu0 0.0
  %1085 = vmatprep.subr.mxu0 0.0
  %1086 = vmatpush1.msra.mxu0 0.0
  %1087 = vmatprep.subr.mxu0 0.0
  %1088 = vmatpush1.msra.mxu0 0.0
  %1089 = vmatprep.subr.mxu0 0.0
  %1090 = vmatpush1.msra.mxu0 0.0
  %1091 = vmatprep.subr.mxu0 0.0
  %1092 = vmatpush1.msra.mxu0 0.0
  %1093 = vmatprep.subr.mxu0 0.0
  %1094 = vmatpush1.msra.mxu0 0.0
  %1095 = vmatprep.subr.mxu0 0.0
  %1096 = vmatpush1.msra.mxu0 0.0
  %1097 = vmatprep.subr.mxu0 0.0
  %1098 = vmatpush1.msra.mxu0 0.0
  %1099 = vmatprep.subr.mxu0 0.0
  %1100 = vmatpush1.msra.mxu0 0.0
  %1101 = vmatprep.subr.mxu0 0.0
  %1102 = vmatpush1.msra.mxu0 0.0
  %1103 = vmatprep.subr.mxu0 0.0
  %1104 = vmatpush1.msra.mxu0 0.0
  %1105 = vmatprep.subr.mxu0 0.0
  %1106 = vmatpush1.msra.mxu0 0.0
  %1107 = vmatprep.subr.mxu0 0.0
  %1108 = vmatpush1.msra.mxu0 0.0
  %1109 = vmatprep.subr.mxu0 0.0
  %1110 = vmatpush1.msra.mxu0 0.0
  %1111 = vmatprep.subr.mxu0 0.0
  %1112 = vmatpush1.msra.mxu0 0.0
  %1113 = vmatprep.subr.mxu0 0.0
  %1114 = vmatpush1.msra.mxu0 0.0
  %1115 = vmatprep.subr.mxu0 0.0
  %1116 = vmatpush1.msra.mxu0 0.0
  %1117 = vmatprep.subr.mxu0 0.0
  %1118 = vmatpush1.msra.mxu0 0.0
  %1119 = vmatprep.subr.mxu0 0.0
  %1120 = vmatpush1.msra.mxu0 0.0
  %1121 = vmatprep.mubr.f32.mxu0 0.0
  %1122 = vmatmul.mubr.f32.gmra.mrb[0].mxu0 %v1055
  %v1123 = vpop.f32.mrb[0].mxu0
  %v1124 = vadd.f32 0.0, %v1123
  %v1125 = vpop.f32.mrb[0].mxu0
  %1126 = vdwg.mxu0
  %1127 = vrot.lane.b32.xlu0 %v192, 64
  %v1128 = vpop.permute.xlu0 %1127
  %v1131 = vsel %vm204, %v890, 0
  %1133 = vmatprep.subr.mxu0 0.0
  %1134 = vmatpush1.msra.mxu0 %v1128
  %1135 = vmatprep.subr.mxu0 0.0
  %1136 = vmatpush1.msra.mxu0 0.0
  %1137 = vmatprep.subr.mxu0 0.0
  %1138 = vmatpush1.msra.mxu0 0.0
  %1139 = vmatprep.subr.mxu0 0.0
  %1140 = vmatpush1.msra.mxu0 0.0
  %1141 = vmatprep.subr.mxu0 0.0
  %1142 = vmatpush1.msra.mxu0 0.0
  %1143 = vmatprep.subr.mxu0 0.0
  %1144 = vmatpush1.msra.mxu0 0.0
  %1145 = vmatprep.subr.mxu0 0.0
  %1146 = vmatpush1.msra.mxu0 0.0
  %1147 = vmatprep.subr.mxu0 0.0
  %1148 = vmatpush1.msra.mxu0 0.0
  %1149 = vmatprep.subr.mxu0 0.0
  %1150 = vmatpush1.msra.mxu0 0.0
  %1151 = vmatprep.subr.mxu0 0.0
  %1152 = vmatpush1.msra.mxu0 0.0
  %1153 = vmatprep.subr.mxu0 0.0
  %1154 = vmatpush1.msra.mxu0 0.0
  %1155 = vmatprep.subr.mxu0 0.0
  %1156 = vmatpush1.msra.mxu0 0.0
  %1157 = vmatprep.subr.mxu0 0.0
  %1158 = vmatpush1.msra.mxu0 0.0
  %1159 = vmatprep.subr.mxu0 0.0
  %1160 = vmatpush1.msra.mxu0 0.0
  %1161 = vmatprep.subr.mxu0 0.0
  %1162 = vmatpush1.msra.mxu0 0.0
  %1163 = vmatprep.subr.mxu0 0.0
  %1164 = vmatpush1.msra.mxu0 0.0
  %1165 = vmatprep.subr.mxu0 0.0
  %1166 = vmatpush1.msra.mxu0 0.0
  %1167 = vmatprep.subr.mxu0 0.0
  %1168 = vmatpush1.msra.mxu0 0.0
  %1169 = vmatprep.subr.mxu0 0.0
  %1170 = vmatpush1.msra.mxu0 0.0
  %1171 = vmatprep.subr.mxu0 0.0
  %1172 = vmatpush1.msra.mxu0 0.0
  %1173 = vmatprep.subr.mxu0 0.0
  %1174 = vmatpush1.msra.mxu0 0.0
  %1175 = vmatprep.subr.mxu0 0.0
  %1176 = vmatpush1.msra.mxu0 0.0
  %1177 = vmatprep.subr.mxu0 0.0
  %1178 = vmatpush1.msra.mxu0 0.0
  %1179 = vmatprep.subr.mxu0 0.0
  %1180 = vmatpush1.msra.mxu0 0.0
  %1181 = vmatprep.subr.mxu0 0.0
  %1182 = vmatpush1.msra.mxu0 0.0
  %1183 = vmatprep.subr.mxu0 0.0
  %1184 = vmatpush1.msra.mxu0 0.0
  %1185 = vmatprep.subr.mxu0 0.0
  %1186 = vmatpush1.msra.mxu0 0.0
  %1187 = vmatprep.subr.mxu0 0.0
  %1188 = vmatpush1.msra.mxu0 0.0
  %1189 = vmatprep.subr.mxu0 0.0
  %1190 = vmatpush1.msra.mxu0 0.0
  %1191 = vmatprep.subr.mxu0 0.0
  %1192 = vmatpush1.msra.mxu0 0.0
  %1193 = vmatprep.subr.mxu0 0.0
  %1194 = vmatpush1.msra.mxu0 0.0
  %1195 = vmatprep.subr.mxu0 0.0
  %1196 = vmatpush1.msra.mxu0 0.0
  %1197 = vmatprep.mubr.f32.mxu0 0.0
  %1198 = vmatmul.mubr.f32.gmra.mrb[0].mxu0 %v1131
  %v1199 = vpop.f32.mrb[0].mxu0
  %v1200 = vadd.f32 0.0, %v1199
  %v1201 = vpop.f32.mrb[0].mxu0
  %1202 = vdwg.mxu0
  %1203 = vrot.lane.b32.xlu0 %v194, 64
  %v1204 = vpop.permute.xlu0 %1203
  %v1207 = vsel %vm204, %v892, 0
  %1209 = vmatprep.subr.mxu0 0.0
  %1210 = vmatpush1.msra.mxu0 %v1204
  %1211 = vmatprep.subr.mxu0 0.0
  %1212 = vmatpush1.msra.mxu0 0.0
  %1213 = vmatprep.subr.mxu0 0.0
  %1214 = vmatpush1.msra.mxu0 0.0
  %1215 = vmatprep.subr.mxu0 0.0
  %1216 = vmatpush1.msra.mxu0 0.0
  %1217 = vmatprep.subr.mxu0 0.0
  %1218 = vmatpush1.msra.mxu0 0.0
  %1219 = vmatprep.subr.mxu0 0.0
  %1220 = vmatpush1.msra.mxu0 0.0
  %1221 = vmatprep.subr.mxu0 0.0
  %1222 = vmatpush1.msra.mxu0 0.0
  %1223 = vmatprep.subr.mxu0 0.0
  %1224 = vmatpush1.msra.mxu0 0.0
  %1225 = vmatprep.subr.mxu0 0.0
  %1226 = vmatpush1.msra.mxu0 0.0
  %1227 = vmatprep.subr.mxu0 0.0
  %1228 = vmatpush1.msra.mxu0 0.0
  %1229 = vmatprep.subr.mxu0 0.0
  %1230 = vmatpush1.msra.mxu0 0.0
  %1231 = vmatprep.subr.mxu0 0.0
  %1232 = vmatpush1.msra.mxu0 0.0
  %1233 = vmatprep.subr.mxu0 0.0
  %1234 = vmatpush1.msra.mxu0 0.0
  %1235 = vmatprep.subr.mxu0 0.0
  %1236 = vmatpush1.msra.mxu0 0.0
  %1237 = vmatprep.subr.mxu0 0.0
  %1238 = vmatpush1.msra.mxu0 0.0
  %1239 = vmatprep.subr.mxu0 0.0
  %1240 = vmatpush1.msra.mxu0 0.0
  %1241 = vmatprep.subr.mxu0 0.0
  %1242 = vmatpush1.msra.mxu0 0.0
  %1243 = vmatprep.subr.mxu0 0.0
  %1244 = vmatpush1.msra.mxu0 0.0
  %1245 = vmatprep.subr.mxu0 0.0
  %1246 = vmatpush1.msra.mxu0 0.0
  %1247 = vmatprep.subr.mxu0 0.0
  %1248 = vmatpush1.msra.mxu0 0.0
  %1249 = vmatprep.subr.mxu0 0.0
  %1250 = vmatpush1.msra.mxu0 0.0
  %1251 = vmatprep.subr.mxu0 0.0
  %1252 = vmatpush1.msra.mxu0 0.0
  %1253 = vmatprep.subr.mxu0 0.0
  %1254 = vmatpush1.msra.mxu0 0.0
  %1255 = vmatprep.subr.mxu0 0.0
  %1256 = vmatpush1.msra.mxu0 0.0
  %1257 = vmatprep.subr.mxu0 0.0
  %1258 = vmatpush1.msra.mxu0 0.0
  %1259 = vmatprep.subr.mxu0 0.0
  %1260 = vmatpush1.msra.mxu0 0.0
  %1261 = vmatprep.subr.mxu0 0.0
  %1262 = vmatpush1.msra.mxu0 0.0
  %1263 = vmatprep.subr.mxu0 0.0
  %1264 = vmatpush1.msra.mxu0 0.0
  %1265 = vmatprep.subr.mxu0 0.0
  %1266 = vmatpush1.msra.mxu0 0.0
  %1267 = vmatprep.subr.mxu0 0.0
  %1268 = vmatpush1.msra.mxu0 0.0
  %1269 = vmatprep.subr.mxu0 0.0
  %1270 = vmatpush1.msra.mxu0 0.0
  %1271 = vmatprep.subr.mxu0 0.0
  %1272 = vmatpush1.msra.mxu0 0.0
  %1273 = vmatprep.mubr.f32.mxu0 0.0
  %1274 = vmatmul.mubr.f32.gmra.mrb[0].mxu0 %v1207
  %v1275 = vpop.f32.mrb[0].mxu0
  %v1276 = vadd.f32 0.0, %v1275
  %v1277 = vpop.f32.mrb[0].mxu0
  %1278 = vdwg.mxu0
  %1279 = vrot.lane.b32.xlu0 %v196, 64
  %v1280 = vpop.permute.xlu0 %1279
  %v1283 = vsel %vm204, %v894, 0
  %1285 = vmatprep.subr.mxu0 0.0
  %1286 = vmatpush1.msra.mxu0 %v1280
  %1287 = vmatprep.subr.mxu0 0.0
  %1288 = vmatpush1.msra.mxu0 0.0
  %1289 = vmatprep.subr.mxu0 0.0
  %1290 = vmatpush1.msra.mxu0 0.0
  %1291 = vmatprep.subr.mxu0 0.0
  %1292 = vmatpush1.msra.mxu0 0.0
  %1293 = vmatprep.subr.mxu0 0.0
  %1294 = vmatpush1.msra.mxu0 0.0
  %1295 = vmatprep.subr.mxu0 0.0
  %1296 = vmatpush1.msra.mxu0 0.0
  %1297 = vmatprep.subr.mxu0 0.0
  %1298 = vmatpush1.msra.mxu0 0.0
  %1299 = vmatprep.subr.mxu0 0.0
  %1300 = vmatpush1.msra.mxu0 0.0
  %1301 = vmatprep.subr.mxu0 0.0
  %1302 = vmatpush1.msra.mxu0 0.0
  %1303 = vmatprep.subr.mxu0 0.0
  %1304 = vmatpush1.msra.mxu0 0.0
  %1305 = vmatprep.subr.mxu0 0.0
  %1306 = vmatpush1.msra.mxu0 0.0
  %1307 = vmatprep.subr.mxu0 0.0
  %1308 = vmatpush1.msra.mxu0 0.0
  %1309 = vmatprep.subr.mxu0 0.0
  %1310 = vmatpush1.msra.mxu0 0.0
  %1311 = vmatprep.subr.mxu0 0.0
  %1312 = vmatpush1.msra.mxu0 0.0
  %1313 = vmatprep.subr.mxu0 0.0
  %1314 = vmatpush1.msra.mxu0 0.0
  %1315 = vmatprep.subr.mxu0 0.0
  %1316 = vmatpush1.msra.mxu0 0.0
  %1317 = vmatprep.subr.mxu0 0.0
  %1318 = vmatpush1.msra.mxu0 0.0
  %1319 = vmatprep.subr.mxu0 0.0
  %1320 = vmatpush1.msra.mxu0 0.0
  %1321 = vmatprep.subr.mxu0 0.0
  %1322 = vmatpush1.msra.mxu0 0.0
  %1323 = vmatprep.subr.mxu0 0.0
  %1324 = vmatpush1.msra.mxu0 0.0
  %1325 = vmatprep.subr.mxu0 0.0
  %1326 = vmatpush1.msra.mxu0 0.0
  %1327 = vmatprep.subr.mxu0 0.0
  %1328 = vmatpush1.msra.mxu0 0.0
  %1329 = vmatprep.subr.mxu0 0.0
  %1330 = vmatpush1.msra.mxu0 0.0
  %1331 = vmatprep.subr.mxu0 0.0
  %1332 = vmatpush1.msra.mxu0 0.0
  %1333 = vmatprep.subr.mxu0 0.0
  %1334 = vmatpush1.msra.mxu0 0.0
  %1335 = vmatprep.subr.mxu0 0.0
  %1336 = vmatpush1.msra.mxu0 0.0
  %1337 = vmatprep.subr.mxu0 0.0
  %1338 = vmatpush1.msra.mxu0 0.0
  %1339 = vmatprep.subr.mxu0 0.0
  %1340 = vmatpush1.msra.mxu0 0.0
  %1341 = vmatprep.subr.mxu0 0.0
  %1342 = vmatpush1.msra.mxu0 0.0
  %1343 = vmatprep.subr.mxu0 0.0
  %1344 = vmatpush1.msra.mxu0 0.0
  %1345 = vmatprep.subr.mxu0 0.0
  %1346 = vmatpush1.msra.mxu0 0.0
  %1347 = vmatprep.subr.mxu0 0.0
  %1348 = vmatpush1.msra.mxu0 0.0
  %1349 = vmatprep.mubr.f32.mxu0 0.0
  %1350 = vmatmul.mubr.f32.gmra.mrb[0].mxu0 %v1283
  %v1351 = vpop.f32.mrb[0].mxu0
  %v1352 = vadd.f32 0.0, %v1351
  %v1353 = vpop.f32.mrb[0].mxu0
  %1354 = vdwg.mxu0
  %1355 = vrot.lane.b32.xlu0 %v198, 64
  %v1356 = vpop.permute.xlu0 %1355
  %v1359 = vsel %vm204, %v896, 0
  %1361 = vmatprep.subr.mxu0 0.0
  %1362 = vmatpush1.msra.mxu0 %v1356
  %1363 = vmatprep.subr.mxu0 0.0
  %1364 = vmatpush1.msra.mxu0 0.0
  %1365 = vmatprep.subr.mxu0 0.0
  %1366 = vmatpush1.msra.mxu0 0.0
  %1367 = vmatprep.subr.mxu0 0.0
  %1368 = vmatpush1.msra.mxu0 0.0
  %1369 = vmatprep.subr.mxu0 0.0
  %1370 = vmatpush1.msra.mxu0 0.0
  %1371 = vmatprep.subr.mxu0 0.0
  %1372 = vmatpush1.msra.mxu0 0.0
  %1373 = vmatprep.subr.mxu0 0.0
  %1374 = vmatpush1.msra.mxu0 0.0
  %1375 = vmatprep.subr.mxu0 0.0
  %1376 = vmatpush1.msra.mxu0 0.0
  %1377 = vmatprep.subr.mxu0 0.0
  %1378 = vmatpush1.msra.mxu0 0.0
  %1379 = vmatprep.subr.mxu0 0.0
  %1380 = vmatpush1.msra.mxu0 0.0
  %1381 = vmatprep.subr.mxu0 0.0
  %1382 = vmatpush1.msra.mxu0 0.0
  %1383 = vmatprep.subr.mxu0 0.0
  %1384 = vmatpush1.msra.mxu0 0.0
  %1385 = vmatprep.subr.mxu0 0.0
  %1386 = vmatpush1.msra.mxu0 0.0
  %1387 = vmatprep.subr.mxu0 0.0
  %1388 = vmatpush1.msra.mxu0 0.0
  %1389 = vmatprep.subr.mxu0 0.0
  %1390 = vmatpush1.msra.mxu0 0.0
  %1391 = vmatprep.subr.mxu0 0.0
  %1392 = vmatpush1.msra.mxu0 0.0
  %1393 = vmatprep.subr.mxu0 0.0
  %1394 = vmatpush1.msra.mxu0 0.0
  %1395 = vmatprep.subr.mxu0 0.0
  %1396 = vmatpush1.msra.mxu0 0.0
  %1397 = vmatprep.subr.mxu0 0.0
  %1398 = vmatpush1.msra.mxu0 0.0
  %1399 = vmatprep.subr.mxu0 0.0
  %1400 = vmatpush1.msra.mxu0 0.0
  %1401 = vmatprep.subr.mxu0 0.0
  %1402 = vmatpush1.msra.mxu0 0.0
  %1403 = vmatprep.subr.mxu0 0.0
  %1404 = vmatpush1.msra.mxu0 0.0
  %1405 = vmatprep.subr.mxu0 0.0
  %1406 = vmatpush1.msra.mxu0 0.0
  %1407 = vmatprep.subr.mxu0 0.0
  %1408 = vmatpush1.msra.mxu0 0.0
  %1409 = vmatprep.subr.mxu0 0.0
  %1410 = vmatpush1.msra.mxu0 0.0
  %1411 = vmatprep.subr.mxu0 0.0
  %1412 = vmatpush1.msra.mxu0 0.0
  %1413 = vmatprep.subr.mxu0 0.0
  %1414 = vmatpush1.msra.mxu0 0.0
  %1415 = vmatprep.subr.mxu0 0.0
  %1416 = vmatpush1.msra.mxu0 0.0
  %1417 = vmatprep.subr.mxu0 0.0
  %1418 = vmatpush1.msra.mxu0 0.0
  %1419 = vmatprep.subr.mxu0 0.0
  %1420 = vmatpush1.msra.mxu0 0.0
  %1421 = vmatprep.subr.mxu0 0.0
  %1422 = vmatpush1.msra.mxu0 0.0
  %1423 = vmatprep.subr.mxu0 0.0
  %1424 = vmatpush1.msra.mxu0 0.0
  %1425 = vmatprep.mubr.f32.mxu0 0.0
  %1426 = vmatmul.mubr.f32.gmra.mrb[0].mxu0 %v1359
  %v1427 = vpop.f32.mrb[0].mxu0
  %v1428 = vadd.f32 0.0, %v1427
  %v1429 = vpop.f32.mrb[0].mxu0
  %1430 = vdwg.mxu0
  %1431 = vrot.lane.b32.xlu0 %v200, 64
  %v1432 = vpop.permute.xlu0 %1431
  %v1435 = vsel %vm204, %v898, 0
  %1437 = vmatprep.subr.mxu0 0.0
  %1438 = vmatpush1.msra.mxu0 %v1432
  %1439 = vmatprep.subr.mxu0 0.0
  %1440 = vmatpush1.msra.mxu0 0.0
  %1441 = vmatprep.subr.mxu0 0.0
  %1442 = vmatpush1.msra.mxu0 0.0
  %1443 = vmatprep.subr.mxu0 0.0
  %1444 = vmatpush1.msra.mxu0 0.0
  %1445 = vmatprep.subr.mxu0 0.0
  %1446 = vmatpush1.msra.mxu0 0.0
  %1447 = vmatprep.subr.mxu0 0.0
  %1448 = vmatpush1.msra.mxu0 0.0
  %1449 = vmatprep.subr.mxu0 0.0
  %1450 = vmatpush1.msra.mxu0 0.0
  %1451 = vmatprep.subr.mxu0 0.0
  %1452 = vmatpush1.msra.mxu0 0.0
  %1453 = vmatprep.subr.mxu0 0.0
  %1454 = vmatpush1.msra.mxu0 0.0
  %1455 = vmatprep.subr.mxu0 0.0
  %1456 = vmatpush1.msra.mxu0 0.0
  %1457 = vmatprep.subr.mxu0 0.0
  %1458 = vmatpush1.msra.mxu0 0.0
  %1459 = vmatprep.subr.mxu0 0.0
  %1460 = vmatpush1.msra.mxu0 0.0
  %1461 = vmatprep.subr.mxu0 0.0
  %1462 = vmatpush1.msra.mxu0 0.0
  %1463 = vmatprep.subr.mxu0 0.0
  %1464 = vmatpush1.msra.mxu0 0.0
  %1465 = vmatprep.subr.mxu0 0.0
  %1466 = vmatpush1.msra.mxu0 0.0
  %1467 = vmatprep.subr.mxu0 0.0
  %1468 = vmatpush1.msra.mxu0 0.0
  %1469 = vmatprep.subr.mxu0 0.0
  %1470 = vmatpush1.msra.mxu0 0.0
  %1471 = vmatprep.subr.mxu0 0.0
  %1472 = vmatpush1.msra.mxu0 0.0
  %1473 = vmatprep.subr.mxu0 0.0
  %1474 = vmatpush1.msra.mxu0 0.0
  %1475 = vmatprep.subr.mxu0 0.0
  %1476 = vmatpush1.msra.mxu0 0.0
  %1477 = vmatprep.subr.mxu0 0.0
  %1478 = vmatpush1.msra.mxu0 0.0
  %1479 = vmatprep.subr.mxu0 0.0
  %1480 = vmatpush1.msra.mxu0 0.0
  %1481 = vmatprep.subr.mxu0 0.0
  %1482 = vmatpush1.msra.mxu0 0.0
  %1483 = vmatprep.subr.mxu0 0.0
  %1484 = vmatpush1.msra.mxu0 0.0
  %1485 = vmatprep.subr.mxu0 0.0
  %1486 = vmatpush1.msra.mxu0 0.0
  %1487 = vmatprep.subr.mxu0 0.0
  %1488 = vmatpush1.msra.mxu0 0.0
  %1489 = vmatprep.subr.mxu0 0.0
  %1490 = vmatpush1.msra.mxu0 0.0
  %1491 = vmatprep.subr.mxu0 0.0
  %1492 = vmatpush1.msra.mxu0 0.0
  %1493 = vmatprep.subr.mxu0 0.0
  %1494 = vmatpush1.msra.mxu0 0.0
  %1495 = vmatprep.subr.mxu0 0.0
  %1496 = vmatpush1.msra.mxu0 0.0
  %1497 = vmatprep.subr.mxu0 0.0
  %1498 = vmatpush1.msra.mxu0 0.0
  %1499 = vmatprep.subr.mxu0 0.0
  %1500 = vmatpush1.msra.mxu0 0.0
  %1501 = vmatprep.mubr.f32.mxu0 0.0
  %1502 = vmatmul.mubr.f32.gmra.mrb[0].mxu0 %v1435
  %v1503 = vpop.f32.mrb[0].mxu0
  %v1504 = vadd.f32 0.0, %v1503
  %v1505 = vpop.f32.mrb[0].mxu0
  %1506 = vdwg.mxu0
  %1509 = vrot.lane.b32.xlu0 %v1124, 8
  %v1510 = vpop.permute.xlu0 %1509
  %1511 = vrot.lane.b32.xlu0 %v1200, 8
  %v1512 = vpop.permute.xlu0 %1511
  %1517 = vrot.lane.b32.xlu0 %v1276, 16
  %v1518 = vpop.permute.xlu0 %1517
  %1519 = vrot.lane.b32.xlu0 %v1352, 16
  %v1520 = vpop.permute.xlu0 %1519
  %1525 = vrot.lane.b32.xlu0 %v1428, 24
  %v1526 = vpop.permute.xlu0 %1525
  %1527 = vrot.lane.b32.xlu0 %v1504, 24
  %v1528 = vpop.permute.xlu0 %1527
  %v1531 = vsel %vm204, %v972, %v1510
  %v1532 = vsel %vm204, %v1048, %v1512
  %vm1533 = vcmask 130048
  %v1534 = vsel %vm1533, %v1531, %v1518
  %v1535 = vsel %vm1533, %v1532, %v1520
  %vm1536 = vcmask 195584
  %v1537 = vsel %vm1536, %v1534, %v1526
  %v1538 = vsel %vm1536, %v1535, %v1528
  %v1539 = vld [vmem:[%s6] sm:$0xff]
  %v1540 = vld [vmem:[%s6 + $0x8] sm:$0xff]
  %v1541 = vld [vmem:[%s6 + $0x10] sm:$0xff]
  %v1542 = vld [vmem:[%s6 + $0x18] sm:$0xff]
  %v1543 = vld [vmem:[%s7] sm:$0x1]
  %v1545 = vlaneseq
  %v1546 = vshrl.u32 %v1545, 7
  %v1547 = vsub.s32 0, %v1546
  %v1548 = vrot.slane %v1543, %v1547
  %v1551 = vsel %vm51, %v1537, 0
  %v1554 = vsel %vm51, %v1538, 0
  %1556 = vmatprep.subr.mxu0 0.0
  %1557 = vmatpush1.msra.mxu0 %v1539
  %1558 = vmatprep.subr.mxu0 0.0
  %1559 = vmatpush1.msra.mxu0 %v1540
  %1560 = vmatprep.subr.mxu0 0.0
  %1561 = vmatpush1.msra.mxu0 %v1541
  %1562 = vmatprep.subr.mxu0 0.0
  %1563 = vmatpush1.msra.mxu0 %v1542
  %1564 = vmatprep.subr.mxu0 0.0
  %1565 = vmatpush1.msra.mxu0 0.0
  %1566 = vmatprep.subr.mxu0 0.0
  %1567 = vmatpush1.msra.mxu0 0.0
  %1568 = vmatprep.subr.mxu0 0.0
  %1569 = vmatpush1.msra.mxu0 0.0
  %1570 = vmatprep.subr.mxu0 0.0
  %1571 = vmatpush1.msra.mxu0 0.0
  %1572 = vmatprep.subr.mxu0 0.0
  %1573 = vmatpush1.msra.mxu0 0.0
  %1574 = vmatprep.subr.mxu0 0.0
  %1575 = vmatpush1.msra.mxu0 0.0
  %1576 = vmatprep.subr.mxu0 0.0
  %1577 = vmatpush1.msra.mxu0 0.0
  %1578 = vmatprep.subr.mxu0 0.0
  %1579 = vmatpush1.msra.mxu0 0.0
  %1580 = vmatprep.subr.mxu0 0.0
  %1581 = vmatpush1.msra.mxu0 0.0
  %1582 = vmatprep.subr.mxu0 0.0
  %1583 = vmatpush1.msra.mxu0 0.0
  %1584 = vmatprep.subr.mxu0 0.0
  %1585 = vmatpush1.msra.mxu0 0.0
  %1586 = vmatprep.subr.mxu0 0.0
  %1587 = vmatpush1.msra.mxu0 0.0
  %1588 = vmatprep.subr.mxu0 0.0
  %1589 = vmatpush1.msra.mxu0 0.0
  %1590 = vmatprep.subr.mxu0 0.0
  %1591 = vmatpush1.msra.mxu0 0.0
  %1592 = vmatprep.subr.mxu0 0.0
  %1593 = vmatpush1.msra.mxu0 0.0
  %1594 = vmatprep.subr.mxu0 0.0
  %1595 = vmatpush1.msra.mxu0 0.0
  %1596 = vmatprep.subr.mxu0 0.0
  %1597 = vmatpush1.msra.mxu0 0.0
  %1598 = vmatprep.subr.mxu0 0.0
  %1599 = vmatpush1.msra.mxu0 0.0
  %1600 = vmatprep.subr.mxu0 0.0
  %1601 = vmatpush1.msra.mxu0 0.0
  %1602 = vmatprep.subr.mxu0 0.0
  %1603 = vmatpush1.msra.mxu0 0.0
  %1604 = vmatprep.subr.mxu0 0.0
  %1605 = vmatpush1.msra.mxu0 0.0
  %1606 = vmatprep.subr.mxu0 0.0
  %1607 = vmatpush1.msra.mxu0 0.0
  %1608 = vmatprep.subr.mxu0 0.0
  %1609 = vmatpush1.msra.mxu0 0.0
  %1610 = vmatprep.subr.mxu0 0.0
  %1611 = vmatpush1.msra.mxu0 0.0
  %1612 = vmatprep.subr.mxu0 0.0
  %1613 = vmatpush1.msra.mxu0 0.0
  %1614 = vmatprep.subr.mxu0 0.0
  %1615 = vmatpush1.msra.mxu0 0.0
  %1616 = vmatprep.subr.mxu0 0.0
  %1617 = vmatpush1.msra.mxu0 0.0
  %1618 = vmatprep.subr.mxu0 0.0
  %1619 = vmatpush1.msra.mxu0 0.0
  %1620 = vmatprep.mubr.f32.mxu0 0.0
  %1621 = vmatmul.mubr.f32.gmra.mrb[0].mxu0 %v1551
  %v1622 = vpop.f32.mrb[0].mxu0
  %v1623 = vadd.f32 %v1548, %v1622
  %v1624 = vpop.f32.mrb[0].mxu0
  %1625 = vmatprep.mubr.f32.mxu0 0.0
  %1626 = vmatmul.mubr.f32.gmra.mrb[0].mxu0 %v1554
  %v1627 = vpop.f32.mrb[0].mxu0
  %v1628 = vadd.f32 %v1548, %v1627
  %v1629 = vpop.f32.mrb[0].mxu0
  %1630 = vdwg.mxu0
  %v1631 = vadd.f32 %v47, %v1623
  %v1632 = vadd.f32 %v48, %v1628
  %v1633 = vld [vmem:[%s8] sm:$0x1]
  %v1634 = vld [vmem:[%s9] sm:$0x1]
  %v1635 = vsel %vm51, %v1631, 0.0
  %1636 = vadd.xlane.f32.xlu0 %v1635
  %v1637 = vpop.xlane.xlu0 %1636
  %v1638 = vsel %vm51, %v1632, 0.0
  %1639 = vadd.xlane.f32.xlu0 %v1638
  %v1640 = vpop.xlane.xlu0 %1639
  %v1641 = vmul.f32 %v1637, %v58
  %v1642 = vmul.f32 %v1640, %v58
  %v1643 = vsub.f32 %v1631, %v1641
  %v1644 = vsub.f32 %v1632, %v1642
  %v1645 = vmul.f32 %v1643, %v1643
  %v1646 = vmul.f32 %v1644, %v1644
  %v1647 = vsel %vm51, %v1645, 0.0
  %1648 = vadd.xlane.f32.xlu0 %v1647
  %v1649 = vpop.xlane.xlu0 %1648
  %v1650 = vsel %vm51, %v1646, 0.0
  %1651 = vadd.xlane.f32.xlu0 %v1650
  %v1652 = vpop.xlane.xlu0 %1651
  %v1653 = vmul.f32 %v1649, %v58
  %v1654 = vmul.f32 %v1652, %v58
  %v1655 = vadd.f32 %v1653, 1e-05
  %v1656 = vadd.f32 %v1654, 1e-05
  %v1657 = vrsqrt.pop %v1655
  %v1658 = vrsqrt.pop %v1656
  %v1659 = vmul.f32 %v1643, %v1657
  %v1660 = vmul.f32 %v1644, %v1658
  %v1662 = vlaneseq
  %v1663 = vshrl.u32 %v1662, 7
  %v1664 = vsub.s32 0, %v1663
  %v1665 = vrot.slane %v1633, %v1664
  %v1667 = vmul.f32 %v1659, %v1665
  %v1668 = vmul.f32 %v1660, %v1665
  %v1670 = vlaneseq
  %v1671 = vshrl.u32 %v1670, 7
  %v1672 = vsub.s32 0, %v1671
  %v1673 = vrot.slane %v1634, %v1672
  %v1675 = vadd.f32 %v1667, %v1673
  %v1676 = vadd.f32 %v1668, %v1673
  %v1677 = vld [vmem:[%s10] sm:$0xff]
  %v1678 = vld [vmem:[%s10 + $0x8] sm:$0xff]
  %v1679 = vld [vmem:[%s10 + $0x10] sm:$0xff]
  %v1680 = vld [vmem:[%s10 + $0x18] sm:$0xff]
  %v1681 = vld [vmem:[%s11] sm:$0x1]
  %v1683 = vlaneseq
  %v1684 = vshrl.u32 %v1683, 7
  %v1685 = vsub.s32 0, %v1684
  %v1686 = vrot.slane %v1681, %v1685
  %v1689 = vsel %vm51, %v1675, 0
  %v1692 = vsel %vm51, %v1676, 0
  %1694 = vmatprep.subr.mxu0 0.0
  %1695 = vmatpush1.msra.mxu0 %v1677
  %1696 = vmatprep.subr.mxu0 0.0
  %1697 = vmatpush1.msra.mxu0 %v1678
  %1698 = vmatprep.subr.mxu0 0.0
  %1699 = vmatpush1.msra.mxu0 %v1679
  %1700 = vmatprep.subr.mxu0 0.0
  %1701 = vmatpush1.msra.mxu0 %v1680
  %1702 = vmatprep.subr.mxu0 0.0
  %1703 = vmatpush1.msra.mxu0 0.0
  %1704 = vmatprep.subr.mxu0 0.0
  %1705 = vmatpush1.msra.mxu0 0.0
  %1706 = vmatprep.subr.mxu0 0.0
  %1707 = vmatpush1.msra.mxu0 0.0
  %1708 = vmatprep.subr.mxu0 0.0
  %1709 = vmatpush1.msra.mxu0 0.0
  %1710 = vmatprep.subr.mxu0 0.0
  %1711 = vmatpush1.msra.mxu0 0.0
  %1712 = vmatprep.subr.mxu0 0.0
  %1713 = vmatpush1.msra.mxu0 0.0
  %1714 = vmatprep.subr.mxu0 0.0
  %1715 = vmatpush1.msra.mxu0 0.0
  %1716 = vmatprep.subr.mxu0 0.0
  %1717 = vmatpush1.msra.mxu0 0.0
  %1718 = vmatprep.subr.mxu0 0.0
  %1719 = vmatpush1.msra.mxu0 0.0
  %1720 = vmatprep.subr.mxu0 0.0
  %1721 = vmatpush1.msra.mxu0 0.0
  %1722 = vmatprep.subr.mxu0 0.0
  %1723 = vmatpush1.msra.mxu0 0.0
  %1724 = vmatprep.subr.mxu0 0.0
  %1725 = vmatpush1.msra.mxu0 0.0
  %1726 = vmatprep.subr.mxu0 0.0
  %1727 = vmatpush1.msra.mxu0 0.0
  %1728 = vmatprep.subr.mxu0 0.0
  %1729 = vmatpush1.msra.mxu0 0.0
  %1730 = vmatprep.subr.mxu0 0.0
  %1731 = vmatpush1.msra.mxu0 0.0
  %1732 = vmatprep.subr.mxu0 0.0
  %1733 = vmatpush1.msra.mxu0 0.0
  %1734 = vmatprep.subr.mxu0 0.0
  %1735 = vmatpush1.msra.mxu0 0.0
  %1736 = vmatprep.subr.mxu0 0.0
  %1737 = vmatpush1.msra.mxu0 0.0
  %1738 = vmatprep.subr.mxu0 0.0
  %1739 = vmatpush1.msra.mxu0 0.0
  %1740 = vmatprep.subr.mxu0 0.0
  %1741 = vmatpush1.msra.mxu0 0.0
  %1742 = vmatprep.subr.mxu0 0.0
  %1743 = vmatpush1.msra.mxu0 0.0
  %1744 = vmatprep.subr.mxu0 0.0
  %1745 = vmatpush1.msra.mxu0 0.0
  %1746 = vmatprep.subr.mxu0 0.0
  %1747 = vmatpush1.msra.mxu0 0.0
  %1748 = vmatprep.subr.mxu0 0.0
  %1749 = vmatpush1.msra.mxu0 0.0
  %1750 = vmatprep.subr.mxu0 0.0
  %1751 = vmatpush1.msra.mxu0 0.0
  %1752 = vmatprep.subr.mxu0 0.0
  %1753 = vmatpush1.msra.mxu0 0.0
  %1754 = vmatprep.subr.mxu0 0.0
  %1755 = vmatpush1.msra.mxu0 0.0
  %1756 = vmatprep.subr.mxu0 0.0
  %1757 = vmatpush1.msra.mxu0 0.0
  %1758 = vmatprep.mubr.f32.mxu0 0.0
  %1759 = vmatmul.mubr.f32.gmra.mrb[0].mxu0 %v1689
  %v1760 = vpop.f32.mrb[0].mxu0
  %v1761 = vadd.f32 %v1686, %v1760
  %v1762 = vpop.f32.mrb[0].mxu0
  %1763 = vmatprep.mubr.f32.mxu0 0.0
  %1764 = vmatmul.mubr.f32.gmra.mrb[0].mxu0 %v1692
  %v1765 = vpop.f32.mrb[0].mxu0
  %v1766 = vadd.f32 %v1686, %v1765
  %v1767 = vpop.f32.mrb[0].mxu0
  %1768 = vdwg.mxu0
  %v1769 = vmul.f32 %v1761, 1.702
  %v1770 = vmul.f32 %v1766, 1.702
  %v1771 = vxor.u32 %v1769, 2147483648
  %v1772 = vxor.u32 %v1770, 2147483648
  %v1773 = vmul.f32 %v1771, 1.442695
  %v1774 = vpow.pop %v1773
  %v1775 = vmul.f32 %v1772, 1.442695
  %v1776 = vpow.pop %v1775
  %v1777 = vadd.f32 %v1774, 1.0
  %v1778 = vadd.f32 %v1776, 1.0
  %v1779 = vrcp.pop %v1777
  %v1780 = vmul.f32 1.0, %v1779
  %v1781 = vrcp.pop %v1778
  %v1782 = vmul.f32 1.0, %v1781
  %v1783 = vmul.f32 %v1761, %v1780
  %v1784 = vmul.f32 %v1766, %v1782
  %v1785 = vld [vmem:[%s12] sm:$0xff]
  %v1786 = vld [vmem:[%s12 + $0x8] sm:$0xff]
  %v1787 = vld [vmem:[%s12 + $0x10] sm:$0xff]
  %v1788 = vld [vmem:[%s12 + $0x18] sm:$0xff]
  %v1789 = vld [vmem:[%s12 + $0x20] sm:$0xff]
  %v1790 = vld [vmem:[%s12 + $0x28] sm:$0xff]
  %v1791 = vld [vmem:[%s12 + $0x30] sm:$0xff]
  %v1792 = vld [vmem:[%s12 + $0x38] sm:$0xff]
  %v1793 = vld [vmem:[%s12 + $0x40] sm:$0xff]
  %v1794 = vld [vmem:[%s12 + $0x48] sm:$0xff]
  %v1795 = vld [vmem:[%s12 + $0x50] sm:$0xff]
  %v1796 = vld [vmem:[%s12 + $0x58] sm:$0xff]
  %v1797 = vld [vmem:[%s12 + $0x60] sm:$0xff]
  %v1798 = vld [vmem:[%s12 + $0x68] sm:$0xff]
  %v1799 = vld [vmem:[%s12 + $0x70] sm:$0xff]
  %v1800 = vld [vmem:[%s12 + $0x78] sm:$0xff]
  %v1801 = vld [vmem:[%s13] sm:$0x1]
  %v1803 = vlaneseq
  %v1804 = vshrl.u32 %v1803, 7
  %v1805 = vsub.s32 0, %v1804
  %v1806 = vrot.slane %v1801, %v1805
  %1808 = vmatprep.subr.mxu0 0.0
  %1809 = vmatpush1.msra.mxu0 %v1785
  %1810 = vmatprep.subr.mxu0 0.0
  %1811 = vmatpush1.msra.mxu0 %v1786
  %1812 = vmatprep.subr.mxu0 0.0
  %1813 = vmatpush1.msra.mxu0 %v1787
  %1814 = vmatprep.subr.mxu0 0.0
  %1815 = vmatpush1.msra.mxu0 %v1788
  %1816 = vmatprep.subr.mxu0 0.0
  %1817 = vmatpush1.msra.mxu0 %v1789
  %1818 = vmatprep.subr.mxu0 0.0
  %1819 = vmatpush1.msra.mxu0 %v1790
  %1820 = vmatprep.subr.mxu0 0.0
  %1821 = vmatpush1.msra.mxu0 %v1791
  %1822 = vmatprep.subr.mxu0 0.0
  %1823 = vmatpush1.msra.mxu0 %v1792
  %1824 = vmatprep.subr.mxu0 0.0
  %1825 = vmatpush1.msra.mxu0 %v1793
  %1826 = vmatprep.subr.mxu0 0.0
  %1827 = vmatpush1.msra.mxu0 %v1794
  %1828 = vmatprep.subr.mxu0 0.0
  %1829 = vmatpush1.msra.mxu0 %v1795
  %1830 = vmatprep.subr.mxu0 0.0
  %1831 = vmatpush1.msra.mxu0 %v1796
  %1832 = vmatprep.subr.mxu0 0.0
  %1833 = vmatpush1.msra.mxu0 %v1797
  %1834 = vmatprep.subr.mxu0 0.0
  %1835 = vmatpush1.msra.mxu0 %v1798
  %1836 = vmatprep.subr.mxu0 0.0
  %1837 = vmatpush1.msra.mxu0 %v1799
  %1838 = vmatprep.subr.mxu0 0.0
  %1839 = vmatpush1.msra.mxu0 %v1800
  %1840 = vmatprep.subr.mxu0 0.0
  %1841 = vmatpush1.msra.mxu0 0.0
  %1842 = vmatprep.subr.mxu0 0.0
  %1843 = vmatpush1.msra.mxu0 0.0
  %1844 = vmatprep.subr.mxu0 0.0
  %1845 = vmatpush1.msra.mxu0 0.0
  %1846 = vmatprep.subr.mxu0 0.0
  %1847 = vmatpush1.msra.mxu0 0.0
  %1848 = vmatprep.subr.mxu0 0.0
  %1849 = vmatpush1.msra.mxu0 0.0
  %1850 = vmatprep.subr.mxu0 0.0
  %1851 = vmatpush1.msra.mxu0 0.0
  %1852 = vmatprep.subr.mxu0 0.0
  %1853 = vmatpush1.msra.mxu0 0.0
  %1854 = vmatprep.subr.mxu0 0.0
  %1855 = vmatpush1.msra.mxu0 0.0
  %1856 = vmatprep.subr.mxu0 0.0
  %1857 = vmatpush1.msra.mxu0 0.0
  %1858 = vmatprep.subr.mxu0 0.0
  %1859 = vmatpush1.msra.mxu0 0.0
  %1860 = vmatprep.subr.mxu0 0.0
  %1861 = vmatpush1.msra.mxu0 0.0
  %1862 = vmatprep.subr.mxu0 0.0
  %1863 = vmatpush1.msra.mxu0 0.0
  %1864 = vmatprep.subr.mxu0 0.0
  %1865 = vmatpush1.msra.mxu0 0.0
  %1866 = vmatprep.subr.mxu0 0.0
  %1867 = vmatpush1.msra.mxu0 0.0
  %1868 = vmatprep.subr.mxu0 0.0
  %1869 = vmatpush1.msra.mxu0 0.0
  %1870 = vmatprep.subr.mxu0 0.0
  %1871 = vmatpush1.msra.mxu0 0.0
  %1872 = vmatprep.mubr.f32.mxu0 0.0
  %1873 = vmatmul.mubr.f32.gmra.mrb[0].mxu0 %v1783
  %v1874 = vpop.f32.mrb[0].mxu0
  %v1875 = vadd.f32 %v1806, %v1874
  %v1876 = vpop.f32.mrb[0].mxu0
  %1877 = vmatprep.mubr.f32.mxu0 0.0
  %1878 = vmatmul.mubr.f32.gmra.mrb[0].mxu0 %v1784
  %v1879 = vpop.f32.mrb[0].mxu0
  %v1880 = vadd.f32 %v1806, %v1879
  %v1881 = vpop.f32.mrb[0].mxu0
  %1882 = vdwg.mxu0
  %v1883 = vadd.f32 %v1631, %v1875
  %v1884 = vadd.f32 %v1632, %v1880
  %1885 = vst.msk [vmem:[%s14] sm:$0xff] %vm51, %v1883
  %1886 = vst.msk [vmem:[%s14 + $0x8] sm:$0xff] %vm51, %v1884
  // Predicated region
  $region58: #{residual_attention_block.1} parent=0 // pred_check
    _
  $region59: #{residual_attention_block.1} parent=0 // pred_check_branch
    %1888 = sbr.rel (0) target = $region61
  $region60: #{residual_attention_block.1} parent=0 // pred_region
    _
  $region61: #{residual_attention_block.1} parent=0 // pred_fallthru
    _
  // Predicated region
  $region62: #{residual_attention_block.1} parent=0 // pred_check
    _
  $region63: #{residual_attention_block.1} parent=0 // pred_check_branch
    %1890 = sbr.rel (0) target = $region65
  $region64: #{residual_attention_block.1} parent=0 // pred_region
    _
  $region65: #{residual_attention_block.1} parent=0 // pred_fallthru
    _

</llo_original>
